<compile_context>
chip_gen: v7x
topology: tpu7x:2x2x1
jax: 0.10.0
libtpu: 0.0.40
codegen_flags: <defaults>
</compile_context>

<pallas_src>
import functools

import jax
import jax.numpy as jnp
from jax import lax
from jax.experimental import pallas as pl
from jax.experimental.pallas import tpu as pltpu


def merge_kernel(mask_ref, w_ref, cin_ref, stin_ref, out_ref, *, D, H, W):
    """One batch element per grid step.

    mask_ref : (27, DHW) f32 VMEM   0/1 validity of each conv tap at each voxel
    w_ref    : (55,)     f32 SMEM   [0:27] folded taps for mean map,
                                    [27:54] folded taps for max map, [54] folded bias
    cin_ref  : (1, C, DHW) VMEM
    stin_ref : (1, C, DHW) VMEM
    out_ref  : (1, C, DHW) VMEM
    """
    DHW = D * H * W
    x_c = cin_ref[0].astype(jnp.float32)            # (C, DHW), lane-dense
    x_s = stin_ref[0].astype(jnp.float32)           # (C, DHW)

    # Channel statistics (sublane-direction reductions).
    avg = jnp.mean(x_c, axis=0, keepdims=True)      # (1, DHW)
    mx = jnp.max(x_c, axis=0, keepdims=True)        # (1, DHW)

    # 3x3x3 conv (2 -> 1 channels) on the flattened spatial axis: the neighbour at
    # spatial offset (kd, kh, kw) lives at flat offset s = kd*H*W + kh*W + kw.
    # Fetch it with a lane rotation; zero the out-of-bounds taps with the
    # precomputed masks.  BatchNorm is already folded into the weights/bias.
    acc = jnp.zeros((1, DHW), jnp.float32)
    tap = 0
    for kd in (-1, 0, 1):
        for kh in (-1, 0, 1):
            for kw in (-1, 0, 1):
                s = kd * H * W + kh * W + kw
                w_a = w_ref[tap]                    # scalar reads from SMEM
                w_m = w_ref[27 + tap]
                if s == 0:
                    acc = acc + (w_a * avg + w_m * mx)
                else:
                    sh = (-s) % DHW                 # roll so position p sees map[p + s]
                    a_sh = pltpu.roll(avg, sh, axis=1)
                    m_sh = pltpu.roll(mx, sh, axis=1)
                    acc = acc + mask_ref[tap:tap + 1, :] * (w_a * a_sh + w_m * m_sh)
                tap += 1

    z = acc + w_ref[54]                             # folded conv + BN bias
    gate = jax.nn.sigmoid(jnp.maximum(z, 0.0))      # ReLU then Sigmoid, (1, DHW)

    # cout + stout = cin * g + stin * (1 - g), gate broadcast over channels.
    out = x_c * gate + x_s * (1.0 - gate)
    out_ref[0] = out.astype(out_ref.dtype)


def merge_forward(cin, stin, params):
    """cin, stin: (B, C, D, H, W) arrays (PyTorch NCDHW convention)."""
    B, C, D, H, W = cin.shape
    DHW = D * H * W
    eps = 1e-5

    # ---- fold BatchNorm3d (eval) into the single-output-channel conv -------------
    scale = params['bn_gamma'][0] / jnp.sqrt(params['bn_var'][0] + eps)
    w = params['conv_w']                            # (1, 2, 3, 3, 3)  OIDHW
    w_avg = (w[0, 0] * scale).reshape(27)           # taps applied to the mean map
    w_max = (w[0, 1] * scale).reshape(27)           # taps applied to the max map
    bias = (params['conv_b'][0] - params['bn_mean'][0]) * scale + params['bn_beta'][0]
    w_all = jnp.concatenate([w_avg, w_max, bias.reshape(1)]).astype(jnp.float32)  # (55,)

    # ---- precomputed 0/1 boundary masks for each of the 27 taps -------------------
    flat = jnp.arange(DHW, dtype=jnp.int32)
    d_i = flat // (H * W)
    h_i = (flat // W) % H
    w_i = flat % W
    rows = []
    for kd in (-1, 0, 1):
        for kh in (-1, 0, 1):
            for kw in (-1, 0, 1):
                ok = ((d_i + kd >= 0) & (d_i + kd < D) &
                      (h_i + kh >= 0) & (h_i + kh < H) &
                      (w_i + kw >= 0) & (w_i + kw < W))
                rows.append(ok.astype(jnp.float32))
    masks = jnp.stack(rows, axis=0)                 # (27, DHW)

    # ---- lane-dense flattening: NCDHW -> (B, C, D*H*W) is a free reshape ----------
    cin_f = cin.reshape(B, C, DHW)
    stin_f = stin.reshape(B, C, DHW)

    kernel = functools.partial(merge_kernel, D=D, H=H, W=W)
    out_f = pl.pallas_call(
        kernel,
        out_shape=jax.ShapeDtypeStruct((B, C, DHW), cin.dtype),
        grid_spec=pltpu.PrefetchScalarGridSpec(
            num_scalar_prefetch=0,
            grid=(B,),
            in_specs=[
                pl.BlockSpec((27, DHW), lambda b: (0, 0)),                # boundary masks
                pl.BlockSpec(memory_space=pltpu.MemorySpace.SMEM),        # folded weights
                pl.BlockSpec((1, C, DHW), lambda b: (b, 0, 0)),           # cin
                pl.BlockSpec((1, C, DHW), lambda b: (b, 0, 0)),           # stin
            ],
            out_specs=pl.BlockSpec((1, C, DHW), lambda b: (b, 0, 0)),
        ),
        compiler_params=pltpu.CompilerParams(
            dimension_semantics=("parallel",),
            vmem_limit_bytes=64 * 1024 * 1024),
    )(masks, w_all, cin_f, stin_f)

    return out_f.reshape(B, C, D, H, W)


def merge_reference(cin, stin, params):
    """Pure-JAX reference matching the PyTorch MERGE forward (eval mode)."""
    eps = 1e-5
    avg = jnp.mean(cin, axis=1, keepdims=True)
    mx = jnp.max(cin, axis=1, keepdims=True)
    c = jnp.concatenate([avg, mx], axis=1)          # (B, 2, D, H, W)
    y = lax.conv_general_dilated(
        c, params['conv_w'], window_strides=(1, 1, 1),
        padding=((1, 1), (1, 1), (1, 1)),
        dimension_numbers=('NCDHW', 'OIDHW', 'NCDHW'))
    y = y + params['conv_b'][None, :, None, None, None]
    s = params['bn_gamma'] / jnp.sqrt(params['bn_var'] + eps)
    y = (y - params['bn_mean'][None, :, None, None, None]) * s[None, :, None, None, None] \
        + params['bn_beta'][None, :, None, None, None]
    y = jnp.maximum(y, 0.0)
    gate = jax.nn.sigmoid(y)
    # NOTE: the torch module also computes self.conv([mean(stin), max(stin)]) but the
    # result is unused; it has no effect on the output in eval mode.
    return cin * gate + stin * (1.0 - gate)


if __name__ == "__main__":
    key = jax.random.PRNGKey(0)
    B, C, D, H, W = 2, 32, 4, 8, 8                  # DHW = 256 -> lane-dense blocks
    k = jax.random.split(key, 8)
    cin = jax.random.normal(k[0], (B, C, D, H, W), jnp.float32)
    stin = jax.random.normal(k[1], (B, C, D, H, W), jnp.float32)

    params = dict(
        conv_w=jax.random.normal(k[2], (1, 2, 3, 3, 3), jnp.float32) * 0.2,
        conv_b=jax.random.normal(k[3], (1,), jnp.float32) * 0.1,
        bn_gamma=jax.random.normal(k[4], (1,), jnp.float32) * 0.1 + 1.0,
        bn_beta=jax.random.normal(k[5], (1,), jnp.float32) * 0.1,
        bn_mean=jax.random.normal(k[6], (1,), jnp.float32) * 0.1,
        bn_var=jax.random.uniform(k[7], (1,), jnp.float32, minval=0.5, maxval=1.5),
    )

    out = merge_forward(cin, stin, params)
    jax.block_until_ready(out)

    ref = merge_reference(cin, stin, params)
    max_err = float(jnp.max(jnp.abs(out - ref)))
    assert jnp.allclose(out, ref, rtol=1e-4, atol=1e-4), f"max err {max_err}"
    print("KERNEL_OK")
</pallas_src>

<mosaic_0001>
module attributes {stable_mosaic.version = 11 : i64} {
  func.func @merge_kernel(%arg0: i32, %arg1: memref<27x256xf32, #tpu.memory_space<vmem>>, %arg2: memref<55xf32, #tpu.memory_space<smem>>, %arg3: memref<1x32x256xf32, #tpu.memory_space<vmem>>, %arg4: memref<1x32x256xf32, #tpu.memory_space<vmem>>, %arg5: memref<1x32x256xf32, #tpu.memory_space<vmem>>) attributes {dimension_semantics = [#tpu.dimension_semantics<parallel>], iteration_bounds = array<i64: 2>, scalar_prefetch = 0 : i64, scratch_operands = 0 : i64, tpu.core_type = #tpu.core_type<tc>, window_params = [{pipeline_mode = #tpu.pipeline_mode<synchronous>, transform_indices = @transform_0, window_bounds = array<i64: 27, 256>}, {transform_indices = @transform_1, window_bounds = array<i64: 55>}, {transform_indices = @transform_2, window_bounds = array<i64: 1, 32, 256>}, {transform_indices = @transform_3, window_bounds = array<i64: 1, 32, 256>}, {transform_indices = @transform_4, window_bounds = array<i64: 1, 32, 256>}]} {
    %c0 = arith.constant 0 : index
    %c0_0 = arith.constant 0 : index
    %c0_1 = arith.constant 0 : index
    %0 = vector.load %arg3[%c0, %c0_0, %c0_1] : memref<1x32x256xf32, #tpu.memory_space<vmem>>, vector<1x32x256xf32>
    %1 = vector.shape_cast %0 : vector<1x32x256xf32> to vector<32x256xf32>
    %c0_2 = arith.constant 0 : index
    %c0_3 = arith.constant 0 : index
    %c0_4 = arith.constant 0 : index
    %2 = vector.load %arg4[%c0_2, %c0_3, %c0_4] : memref<1x32x256xf32, #tpu.memory_space<vmem>>, vector<1x32x256xf32>
    %3 = vector.shape_cast %2 : vector<1x32x256xf32> to vector<32x256xf32>
    %cst = arith.constant dense<0.000000e+00> : vector<256xf32>
    %4 = vector.multi_reduction <add>, %1, %cst [0] : vector<32x256xf32> to vector<256xf32>
    %5 = vector.shape_cast %4 : vector<256xf32> to vector<1x256xf32>
    %cst_5 = arith.constant 3.200000e+01 : f32
    %6 = vector.broadcast %cst_5 : f32 to vector<1x256xf32>
    %7 = arith.divf %5, %6 : vector<1x256xf32>
    %cst_6 = arith.constant dense<0xFF800000> : vector<256xf32>
    %8 = vector.multi_reduction <maximumf>, %1, %cst_6 [0] : vector<32x256xf32> to vector<256xf32>
    %9 = vector.shape_cast %8 : vector<256xf32> to vector<1x256xf32>
    %cst_7 = arith.constant 0.000000e+00 : f32
    %10 = vector.broadcast %cst_7 : f32 to vector<1x256xf32>
    %c0_8 = arith.constant 0 : index
    %11 = memref.load %arg2[%c0_8] : memref<55xf32, #tpu.memory_space<smem>>
    %c27 = arith.constant 27 : index
    %12 = memref.load %arg2[%c27] : memref<55xf32, #tpu.memory_space<smem>>
    %c73_i32 = arith.constant 73 : i32
    %13 = tpu.dynamic_rotate %7 by %c73_i32 dim 1 : vector<1x256xf32>, i32 -> vector<1x256xf32>
    %c73_i32_9 = arith.constant 73 : i32
    %14 = tpu.dynamic_rotate %9 by %c73_i32_9 dim 1 : vector<1x256xf32>, i32 -> vector<1x256xf32>
    %c0_10 = arith.constant 0 : index
    %c0_11 = arith.constant 0 : index
    %15 = vector.load %arg1[%c0_10, %c0_11] : memref<27x256xf32, #tpu.memory_space<vmem>>, vector<1x256xf32>
    %16 = vector.broadcast %11 : f32 to vector<1x256xf32>
    %17 = arith.mulf %16, %13 : vector<1x256xf32>
    %18 = vector.broadcast %12 : f32 to vector<1x256xf32>
    %19 = arith.mulf %18, %14 : vector<1x256xf32>
    %20 = arith.addf %17, %19 : vector<1x256xf32>
    %21 = arith.mulf %15, %20 : vector<1x256xf32>
    %22 = arith.addf %10, %21 : vector<1x256xf32>
    %c1 = arith.constant 1 : index
    %23 = memref.load %arg2[%c1] : memref<55xf32, #tpu.memory_space<smem>>
    %c28 = arith.constant 28 : index
    %24 = memref.load %arg2[%c28] : memref<55xf32, #tpu.memory_space<smem>>
    %c72_i32 = arith.constant 72 : i32
    %25 = tpu.dynamic_rotate %7 by %c72_i32 dim 1 : vector<1x256xf32>, i32 -> vector<1x256xf32>
    %c72_i32_12 = arith.constant 72 : i32
    %26 = tpu.dynamic_rotate %9 by %c72_i32_12 dim 1 : vector<1x256xf32>, i32 -> vector<1x256xf32>
    %c1_13 = arith.constant 1 : index
    %c0_14 = arith.constant 0 : index
    %27 = vector.load %arg1[%c1_13, %c0_14] : memref<27x256xf32, #tpu.memory_space<vmem>>, vector<1x256xf32>
    %28 = vector.broadcast %23 : f32 to vector<1x256xf32>
    %29 = arith.mulf %28, %25 : vector<1x256xf32>
    %30 = vector.broadcast %24 : f32 to vector<1x256xf32>
    %31 = arith.mulf %30, %26 : vector<1x256xf32>
    %32 = arith.addf %29, %31 : vector<1x256xf32>
    %33 = arith.mulf %27, %32 : vector<1x256xf32>
    %34 = arith.addf %22, %33 : vector<1x256xf32>
    %c2 = arith.constant 2 : index
    %35 = memref.load %arg2[%c2] : memref<55xf32, #tpu.memory_space<smem>>
    %c29 = arith.constant 29 : index
    %36 = memref.load %arg2[%c29] : memref<55xf32, #tpu.memory_space<smem>>
    %c71_i32 = arith.constant 71 : i32
    %37 = tpu.dynamic_rotate %7 by %c71_i32 dim 1 : vector<1x256xf32>, i32 -> vector<1x256xf32>
    %c71_i32_15 = arith.constant 71 : i32
    %38 = tpu.dynamic_rotate %9 by %c71_i32_15 dim 1 : vector<1x256xf32>, i32 -> vector<1x256xf32>
    %c2_16 = arith.constant 2 : index
    %c0_17 = arith.constant 0 : index
    %39 = vector.load %arg1[%c2_16, %c0_17] : memref<27x256xf32, #tpu.memory_space<vmem>>, vector<1x256xf32>
    %40 = vector.broadcast %35 : f32 to vector<1x256xf32>
    %41 = arith.mulf %40, %37 : vector<1x256xf32>
    %42 = vector.broadcast %36 : f32 to vector<1x256xf32>
    %43 = arith.mulf %42, %38 : vector<1x256xf32>
    %44 = arith.addf %41, %43 : vector<1x256xf32>
    %45 = arith.mulf %39, %44 : vector<1x256xf32>
    %46 = arith.addf %34, %45 : vector<1x256xf32>
    %c3 = arith.constant 3 : index
    %47 = memref.load %arg2[%c3] : memref<55xf32, #tpu.memory_space<smem>>
    %c30 = arith.constant 30 : index
    %48 = memref.load %arg2[%c30] : memref<55xf32, #tpu.memory_space<smem>>
    %c65_i32 = arith.constant 65 : i32
    %49 = tpu.dynamic_rotate %7 by %c65_i32 dim 1 : vector<1x256xf32>, i32 -> vector<1x256xf32>
    %c65_i32_18 = arith.constant 65 : i32
    %50 = tpu.dynamic_rotate %9 by %c65_i32_18 dim 1 : vector<1x256xf32>, i32 -> vector<1x256xf32>
    %c3_19 = arith.constant 3 : index
    %c0_20 = arith.constant 0 : index
    %51 = vector.load %arg1[%c3_19, %c0_20] : memref<27x256xf32, #tpu.memory_space<vmem>>, vector<1x256xf32>
    %52 = vector.broadcast %47 : f32 to vector<1x256xf32>
    %53 = arith.mulf %52, %49 : vector<1x256xf32>
    %54 = vector.broadcast %48 : f32 to vector<1x256xf32>
    %55 = arith.mulf %54, %50 : vector<1x256xf32>
    %56 = arith.addf %53, %55 : vector<1x256xf32>
    %57 = arith.mulf %51, %56 : vector<1x256xf32>
    %58 = arith.addf %46, %57 : vector<1x256xf32>
    %c4 = arith.constant 4 : index
    %59 = memref.load %arg2[%c4] : memref<55xf32, #tpu.memory_space<smem>>
    %c31 = arith.constant 31 : index
    %60 = memref.load %arg2[%c31] : memref<55xf32, #tpu.memory_space<smem>>
    %c64_i32 = arith.constant 64 : i32
    %61 = tpu.dynamic_rotate %7 by %c64_i32 dim 1 : vector<1x256xf32>, i32 -> vector<1x256xf32>
    %c64_i32_21 = arith.constant 64 : i32
    %62 = tpu.dynamic_rotate %9 by %c64_i32_21 dim 1 : vector<1x256xf32>, i32 -> vector<1x256xf32>
    %c4_22 = arith.constant 4 : index
    %c0_23 = arith.constant 0 : index
    %63 = vector.load %arg1[%c4_22, %c0_23] : memref<27x256xf32, #tpu.memory_space<vmem>>, vector<1x256xf32>
    %64 = vector.broadcast %59 : f32 to vector<1x256xf32>
    %65 = arith.mulf %64, %61 : vector<1x256xf32>
    %66 = vector.broadcast %60 : f32 to vector<1x256xf32>
    %67 = arith.mulf %66, %62 : vector<1x256xf32>
    %68 = arith.addf %65, %67 : vector<1x256xf32>
    %69 = arith.mulf %63, %68 : vector<1x256xf32>
    %70 = arith.addf %58, %69 : vector<1x256xf32>
    %c5 = arith.constant 5 : index
    %71 = memref.load %arg2[%c5] : memref<55xf32, #tpu.memory_space<smem>>
    %c32 = arith.constant 32 : index
    %72 = memref.load %arg2[%c32] : memref<55xf32, #tpu.memory_space<smem>>
    %c63_i32 = arith.constant 63 : i32
    %73 = tpu.dynamic_rotate %7 by %c63_i32 dim 1 : vector<1x256xf32>, i32 -> vector<1x256xf32>
    %c63_i32_24 = arith.constant 63 : i32
    %74 = tpu.dynamic_rotate %9 by %c63_i32_24 dim 1 : vector<1x256xf32>, i32 -> vector<1x256xf32>
    %c5_25 = arith.constant 5 : index
    %c0_26 = arith.constant 0 : index
    %75 = vector.load %arg1[%c5_25, %c0_26] : memref<27x256xf32, #tpu.memory_space<vmem>>, vector<1x256xf32>
    %76 = vector.broadcast %71 : f32 to vector<1x256xf32>
    %77 = arith.mulf %76, %73 : vector<1x256xf32>
    %78 = vector.broadcast %72 : f32 to vector<1x256xf32>
    %79 = arith.mulf %78, %74 : vector<1x256xf32>
    %80 = arith.addf %77, %79 : vector<1x256xf32>
    %81 = arith.mulf %75, %80 : vector<1x256xf32>
    %82 = arith.addf %70, %81 : vector<1x256xf32>
    %c6 = arith.constant 6 : index
    %83 = memref.load %arg2[%c6] : memref<55xf32, #tpu.memory_space<smem>>
    %c33 = arith.constant 33 : index
    %84 = memref.load %arg2[%c33] : memref<55xf32, #tpu.memory_space<smem>>
    %c57_i32 = arith.constant 57 : i32
    %85 = tpu.dynamic_rotate %7 by %c57_i32 dim 1 : vector<1x256xf32>, i32 -> vector<1x256xf32>
    %c57_i32_27 = arith.constant 57 : i32
    %86 = tpu.dynamic_rotate %9 by %c57_i32_27 dim 1 : vector<1x256xf32>, i32 -> vector<1x256xf32>
    %c6_28 = arith.constant 6 : index
    %c0_29 = arith.constant 0 : index
    %87 = vector.load %arg1[%c6_28, %c0_29] : memref<27x256xf32, #tpu.memory_space<vmem>>, vector<1x256xf32>
    %88 = vector.broadcast %83 : f32 to vector<1x256xf32>
    %89 = arith.mulf %88, %85 : vector<1x256xf32>
    %90 = vector.broadcast %84 : f32 to vector<1x256xf32>
    %91 = arith.mulf %90, %86 : vector<1x256xf32>
    %92 = arith.addf %89, %91 : vector<1x256xf32>
    %93 = arith.mulf %87, %92 : vector<1x256xf32>
    %94 = arith.addf %82, %93 : vector<1x256xf32>
    %c7 = arith.constant 7 : index
    %95 = memref.load %arg2[%c7] : memref<55xf32, #tpu.memory_space<smem>>
    %c34 = arith.constant 34 : index
    %96 = memref.load %arg2[%c34] : memref<55xf32, #tpu.memory_space<smem>>
    %c56_i32 = arith.constant 56 : i32
    %97 = tpu.dynamic_rotate %7 by %c56_i32 dim 1 : vector<1x256xf32>, i32 -> vector<1x256xf32>
    %c56_i32_30 = arith.constant 56 : i32
    %98 = tpu.dynamic_rotate %9 by %c56_i32_30 dim 1 : vector<1x256xf32>, i32 -> vector<1x256xf32>
    %c7_31 = arith.constant 7 : index
    %c0_32 = arith.constant 0 : index
    %99 = vector.load %arg1[%c7_31, %c0_32] : memref<27x256xf32, #tpu.memory_space<vmem>>, vector<1x256xf32>
    %100 = vector.broadcast %95 : f32 to vector<1x256xf32>
    %101 = arith.mulf %100, %97 : vector<1x256xf32>
    %102 = vector.broadcast %96 : f32 to vector<1x256xf32>
    %103 = arith.mulf %102, %98 : vector<1x256xf32>
    %104 = arith.addf %101, %103 : vector<1x256xf32>
    %105 = arith.mulf %99, %104 : vector<1x256xf32>
    %106 = arith.addf %94, %105 : vector<1x256xf32>
    %c8 = arith.constant 8 : index
    %107 = memref.load %arg2[%c8] : memref<55xf32, #tpu.memory_space<smem>>
    %c35 = arith.constant 35 : index
    %108 = memref.load %arg2[%c35] : memref<55xf32, #tpu.memory_space<smem>>
    %c55_i32 = arith.constant 55 : i32
    %109 = tpu.dynamic_rotate %7 by %c55_i32 dim 1 : vector<1x256xf32>, i32 -> vector<1x256xf32>
    %c55_i32_33 = arith.constant 55 : i32
    %110 = tpu.dynamic_rotate %9 by %c55_i32_33 dim 1 : vector<1x256xf32>, i32 -> vector<1x256xf32>
    %c8_34 = arith.constant 8 : index
    %c0_35 = arith.constant 0 : index
    %111 = vector.load %arg1[%c8_34, %c0_35] : memref<27x256xf32, #tpu.memory_space<vmem>>, vector<1x256xf32>
    %112 = vector.broadcast %107 : f32 to vector<1x256xf32>
    %113 = arith.mulf %112, %109 : vector<1x256xf32>
    %114 = vector.broadcast %108 : f32 to vector<1x256xf32>
    %115 = arith.mulf %114, %110 : vector<1x256xf32>
    %116 = arith.addf %113, %115 : vector<1x256xf32>
    %117 = arith.mulf %111, %116 : vector<1x256xf32>
    %118 = arith.addf %106, %117 : vector<1x256xf32>
    %c9 = arith.constant 9 : index
    %119 = memref.load %arg2[%c9] : memref<55xf32, #tpu.memory_space<smem>>
    %c36 = arith.constant 36 : index
    %120 = memref.load %arg2[%c36] : memref<55xf32, #tpu.memory_space<smem>>
    %c9_i32 = arith.constant 9 : i32
    %121 = tpu.dynamic_rotate %7 by %c9_i32 dim 1 : vector<1x256xf32>, i32 -> vector<1x256xf32>
    %c9_i32_36 = arith.constant 9 : i32
    %122 = tpu.dynamic_rotate %9 by %c9_i32_36 dim 1 : vector<1x256xf32>, i32 -> vector<1x256xf32>
    %c9_37 = arith.constant 9 : index
    %c0_38 = arith.constant 0 : index
    %123 = vector.load %arg1[%c9_37, %c0_38] : memref<27x256xf32, #tpu.memory_space<vmem>>, vector<1x256xf32>
    %124 = vector.broadcast %119 : f32 to vector<1x256xf32>
    %125 = arith.mulf %124, %121 : vector<1x256xf32>
    %126 = vector.broadcast %120 : f32 to vector<1x256xf32>
    %127 = arith.mulf %126, %122 : vector<1x256xf32>
    %128 = arith.addf %125, %127 : vector<1x256xf32>
    %129 = arith.mulf %123, %128 : vector<1x256xf32>
    %130 = arith.addf %118, %129 : vector<1x256xf32>
    %c10 = arith.constant 10 : index
    %131 = memref.load %arg2[%c10] : memref<55xf32, #tpu.memory_space<smem>>
    %c37 = arith.constant 37 : index
    %132 = memref.load %arg2[%c37] : memref<55xf32, #tpu.memory_space<smem>>
    %c8_i32 = arith.constant 8 : i32
    %133 = tpu.dynamic_rotate %7 by %c8_i32 dim 1 : vector<1x256xf32>, i32 -> vector<1x256xf32>
    %c8_i32_39 = arith.constant 8 : i32
    %134 = tpu.dynamic_rotate %9 by %c8_i32_39 dim 1 : vector<1x256xf32>, i32 -> vector<1x256xf32>
    %c10_40 = arith.constant 10 : index
    %c0_41 = arith.constant 0 : index
    %135 = vector.load %arg1[%c10_40, %c0_41] : memref<27x256xf32, #tpu.memory_space<vmem>>, vector<1x256xf32>
    %136 = vector.broadcast %131 : f32 to vector<1x256xf32>
    %137 = arith.mulf %136, %133 : vector<1x256xf32>
    %138 = vector.broadcast %132 : f32 to vector<1x256xf32>
    %139 = arith.mulf %138, %134 : vector<1x256xf32>
    %140 = arith.addf %137, %139 : vector<1x256xf32>
    %141 = arith.mulf %135, %140 : vector<1x256xf32>
    %142 = arith.addf %130, %141 : vector<1x256xf32>
    %c11 = arith.constant 11 : index
    %143 = memref.load %arg2[%c11] : memref<55xf32, #tpu.memory_space<smem>>
    %c38 = arith.constant 38 : index
    %144 = memref.load %arg2[%c38] : memref<55xf32, #tpu.memory_space<smem>>
    %c7_i32 = arith.constant 7 : i32
    %145 = tpu.dynamic_rotate %7 by %c7_i32 dim 1 : vector<1x256xf32>, i32 -> vector<1x256xf32>
    %c7_i32_42 = arith.constant 7 : i32
    %146 = tpu.dynamic_rotate %9 by %c7_i32_42 dim 1 : vector<1x256xf32>, i32 -> vector<1x256xf32>
    %c11_43 = arith.constant 11 : index
    %c0_44 = arith.constant 0 : index
    %147 = vector.load %arg1[%c11_43, %c0_44] : memref<27x256xf32, #tpu.memory_space<vmem>>, vector<1x256xf32>
    %148 = vector.broadcast %143 : f32 to vector<1x256xf32>
    %149 = arith.mulf %148, %145 : vector<1x256xf32>
    %150 = vector.broadcast %144 : f32 to vector<1x256xf32>
    %151 = arith.mulf %150, %146 : vector<1x256xf32>
    %152 = arith.addf %149, %151 : vector<1x256xf32>
    %153 = arith.mulf %147, %152 : vector<1x256xf32>
    %154 = arith.addf %142, %153 : vector<1x256xf32>
    %c12 = arith.constant 12 : index
    %155 = memref.load %arg2[%c12] : memref<55xf32, #tpu.memory_space<smem>>
    %c39 = arith.constant 39 : index
    %156 = memref.load %arg2[%c39] : memref<55xf32, #tpu.memory_space<smem>>
    %c1_i32 = arith.constant 1 : i32
    %157 = tpu.dynamic_rotate %7 by %c1_i32 dim 1 : vector<1x256xf32>, i32 -> vector<1x256xf32>
    %c1_i32_45 = arith.constant 1 : i32
    %158 = tpu.dynamic_rotate %9 by %c1_i32_45 dim 1 : vector<1x256xf32>, i32 -> vector<1x256xf32>
    %c12_46 = arith.constant 12 : index
    %c0_47 = arith.constant 0 : index
    %159 = vector.load %arg1[%c12_46, %c0_47] : memref<27x256xf32, #tpu.memory_space<vmem>>, vector<1x256xf32>
    %160 = vector.broadcast %155 : f32 to vector<1x256xf32>
    %161 = arith.mulf %160, %157 : vector<1x256xf32>
    %162 = vector.broadcast %156 : f32 to vector<1x256xf32>
    %163 = arith.mulf %162, %158 : vector<1x256xf32>
    %164 = arith.addf %161, %163 : vector<1x256xf32>
    %165 = arith.mulf %159, %164 : vector<1x256xf32>
    %166 = arith.addf %154, %165 : vector<1x256xf32>
    %c13 = arith.constant 13 : index
    %167 = memref.load %arg2[%c13] : memref<55xf32, #tpu.memory_space<smem>>
    %c40 = arith.constant 40 : index
    %168 = memref.load %arg2[%c40] : memref<55xf32, #tpu.memory_space<smem>>
    %169 = vector.broadcast %167 : f32 to vector<1x256xf32>
    %170 = arith.mulf %169, %7 : vector<1x256xf32>
    %171 = vector.broadcast %168 : f32 to vector<1x256xf32>
    %172 = arith.mulf %171, %9 : vector<1x256xf32>
    %173 = arith.addf %170, %172 : vector<1x256xf32>
    %174 = arith.addf %166, %173 : vector<1x256xf32>
    %c14 = arith.constant 14 : index
    %175 = memref.load %arg2[%c14] : memref<55xf32, #tpu.memory_space<smem>>
    %c41 = arith.constant 41 : index
    %176 = memref.load %arg2[%c41] : memref<55xf32, #tpu.memory_space<smem>>
    %c255_i32 = arith.constant 255 : i32
    %177 = tpu.dynamic_rotate %7 by %c255_i32 dim 1 : vector<1x256xf32>, i32 -> vector<1x256xf32>
    %c255_i32_48 = arith.constant 255 : i32
    %178 = tpu.dynamic_rotate %9 by %c255_i32_48 dim 1 : vector<1x256xf32>, i32 -> vector<1x256xf32>
    %c14_49 = arith.constant 14 : index
    %c0_50 = arith.constant 0 : index
    %179 = vector.load %arg1[%c14_49, %c0_50] : memref<27x256xf32, #tpu.memory_space<vmem>>, vector<1x256xf32>
    %180 = vector.broadcast %175 : f32 to vector<1x256xf32>
    %181 = arith.mulf %180, %177 : vector<1x256xf32>
    %182 = vector.broadcast %176 : f32 to vector<1x256xf32>
    %183 = arith.mulf %182, %178 : vector<1x256xf32>
    %184 = arith.addf %181, %183 : vector<1x256xf32>
    %185 = arith.mulf %179, %184 : vector<1x256xf32>
    %186 = arith.addf %174, %185 : vector<1x256xf32>
    %c15 = arith.constant 15 : index
    %187 = memref.load %arg2[%c15] : memref<55xf32, #tpu.memory_space<smem>>
    %c42 = arith.constant 42 : index
    %188 = memref.load %arg2[%c42] : memref<55xf32, #tpu.memory_space<smem>>
    %c249_i32 = arith.constant 249 : i32
    %189 = tpu.dynamic_rotate %7 by %c249_i32 dim 1 : vector<1x256xf32>, i32 -> vector<1x256xf32>
    %c249_i32_51 = arith.constant 249 : i32
    %190 = tpu.dynamic_rotate %9 by %c249_i32_51 dim 1 : vector<1x256xf32>, i32 -> vector<1x256xf32>
    %c15_52 = arith.constant 15 : index
    %c0_53 = arith.constant 0 : index
    %191 = vector.load %arg1[%c15_52, %c0_53] : memref<27x256xf32, #tpu.memory_space<vmem>>, vector<1x256xf32>
    %192 = vector.broadcast %187 : f32 to vector<1x256xf32>
    %193 = arith.mulf %192, %189 : vector<1x256xf32>
    %194 = vector.broadcast %188 : f32 to vector<1x256xf32>
    %195 = arith.mulf %194, %190 : vector<1x256xf32>
    %196 = arith.addf %193, %195 : vector<1x256xf32>
    %197 = arith.mulf %191, %196 : vector<1x256xf32>
    %198 = arith.addf %186, %197 : vector<1x256xf32>
    %c16 = arith.constant 16 : index
    %199 = memref.load %arg2[%c16] : memref<55xf32, #tpu.memory_space<smem>>
    %c43 = arith.constant 43 : index
    %200 = memref.load %arg2[%c43] : memref<55xf32, #tpu.memory_space<smem>>
    %c248_i32 = arith.constant 248 : i32
    %201 = tpu.dynamic_rotate %7 by %c248_i32 dim 1 : vector<1x256xf32>, i32 -> vector<1x256xf32>
    %c248_i32_54 = arith.constant 248 : i32
    %202 = tpu.dynamic_rotate %9 by %c248_i32_54 dim 1 : vector<1x256xf32>, i32 -> vector<1x256xf32>
    %c16_55 = arith.constant 16 : index
    %c0_56 = arith.constant 0 : index
    %203 = vector.load %arg1[%c16_55, %c0_56] : memref<27x256xf32, #tpu.memory_space<vmem>>, vector<1x256xf32>
    %204 = vector.broadcast %199 : f32 to vector<1x256xf32>
    %205 = arith.mulf %204, %201 : vector<1x256xf32>
    %206 = vector.broadcast %200 : f32 to vector<1x256xf32>
    %207 = arith.mulf %206, %202 : vector<1x256xf32>
    %208 = arith.addf %205, %207 : vector<1x256xf32>
    %209 = arith.mulf %203, %208 : vector<1x256xf32>
    %210 = arith.addf %198, %209 : vector<1x256xf32>
    %c17 = arith.constant 17 : index
    %211 = memref.load %arg2[%c17] : memref<55xf32, #tpu.memory_space<smem>>
    %c44 = arith.constant 44 : index
    %212 = memref.load %arg2[%c44] : memref<55xf32, #tpu.memory_space<smem>>
    %c247_i32 = arith.constant 247 : i32
    %213 = tpu.dynamic_rotate %7 by %c247_i32 dim 1 : vector<1x256xf32>, i32 -> vector<1x256xf32>
    %c247_i32_57 = arith.constant 247 : i32
    %214 = tpu.dynamic_rotate %9 by %c247_i32_57 dim 1 : vector<1x256xf32>, i32 -> vector<1x256xf32>
    %c17_58 = arith.constant 17 : index
    %c0_59 = arith.constant 0 : index
    %215 = vector.load %arg1[%c17_58, %c0_59] : memref<27x256xf32, #tpu.memory_space<vmem>>, vector<1x256xf32>
    %216 = vector.broadcast %211 : f32 to vector<1x256xf32>
    %217 = arith.mulf %216, %213 : vector<1x256xf32>
    %218 = vector.broadcast %212 : f32 to vector<1x256xf32>
    %219 = arith.mulf %218, %214 : vector<1x256xf32>
    %220 = arith.addf %217, %219 : vector<1x256xf32>
    %221 = arith.mulf %215, %220 : vector<1x256xf32>
    %222 = arith.addf %210, %221 : vector<1x256xf32>
    %c18 = arith.constant 18 : index
    %223 = memref.load %arg2[%c18] : memref<55xf32, #tpu.memory_space<smem>>
    %c45 = arith.constant 45 : index
    %224 = memref.load %arg2[%c45] : memref<55xf32, #tpu.memory_space<smem>>
    %c201_i32 = arith.constant 201 : i32
    %225 = tpu.dynamic_rotate %7 by %c201_i32 dim 1 : vector<1x256xf32>, i32 -> vector<1x256xf32>
    %c201_i32_60 = arith.constant 201 : i32
    %226 = tpu.dynamic_rotate %9 by %c201_i32_60 dim 1 : vector<1x256xf32>, i32 -> vector<1x256xf32>
    %c18_61 = arith.constant 18 : index
    %c0_62 = arith.constant 0 : index
    %227 = vector.load %arg1[%c18_61, %c0_62] : memref<27x256xf32, #tpu.memory_space<vmem>>, vector<1x256xf32>
    %228 = vector.broadcast %223 : f32 to vector<1x256xf32>
    %229 = arith.mulf %228, %225 : vector<1x256xf32>
    %230 = vector.broadcast %224 : f32 to vector<1x256xf32>
    %231 = arith.mulf %230, %226 : vector<1x256xf32>
    %232 = arith.addf %229, %231 : vector<1x256xf32>
    %233 = arith.mulf %227, %232 : vector<1x256xf32>
    %234 = arith.addf %222, %233 : vector<1x256xf32>
    %c19 = arith.constant 19 : index
    %235 = memref.load %arg2[%c19] : memref<55xf32, #tpu.memory_space<smem>>
    %c46 = arith.constant 46 : index
    %236 = memref.load %arg2[%c46] : memref<55xf32, #tpu.memory_space<smem>>
    %c200_i32 = arith.constant 200 : i32
    %237 = tpu.dynamic_rotate %7 by %c200_i32 dim 1 : vector<1x256xf32>, i32 -> vector<1x256xf32>
    %c200_i32_63 = arith.constant 200 : i32
    %238 = tpu.dynamic_rotate %9 by %c200_i32_63 dim 1 : vector<1x256xf32>, i32 -> vector<1x256xf32>
    %c19_64 = arith.constant 19 : index
    %c0_65 = arith.constant 0 : index
    %239 = vector.load %arg1[%c19_64, %c0_65] : memref<27x256xf32, #tpu.memory_space<vmem>>, vector<1x256xf32>
    %240 = vector.broadcast %235 : f32 to vector<1x256xf32>
    %241 = arith.mulf %240, %237 : vector<1x256xf32>
    %242 = vector.broadcast %236 : f32 to vector<1x256xf32>
    %243 = arith.mulf %242, %238 : vector<1x256xf32>
    %244 = arith.addf %241, %243 : vector<1x256xf32>
    %245 = arith.mulf %239, %244 : vector<1x256xf32>
    %246 = arith.addf %234, %245 : vector<1x256xf32>
    %c20 = arith.constant 20 : index
    %247 = memref.load %arg2[%c20] : memref<55xf32, #tpu.memory_space<smem>>
    %c47 = arith.constant 47 : index
    %248 = memref.load %arg2[%c47] : memref<55xf32, #tpu.memory_space<smem>>
    %c199_i32 = arith.constant 199 : i32
    %249 = tpu.dynamic_rotate %7 by %c199_i32 dim 1 : vector<1x256xf32>, i32 -> vector<1x256xf32>
    %c199_i32_66 = arith.constant 199 : i32
    %250 = tpu.dynamic_rotate %9 by %c199_i32_66 dim 1 : vector<1x256xf32>, i32 -> vector<1x256xf32>
    %c20_67 = arith.constant 20 : index
    %c0_68 = arith.constant 0 : index
    %251 = vector.load %arg1[%c20_67, %c0_68] : memref<27x256xf32, #tpu.memory_space<vmem>>, vector<1x256xf32>
    %252 = vector.broadcast %247 : f32 to vector<1x256xf32>
    %253 = arith.mulf %252, %249 : vector<1x256xf32>
    %254 = vector.broadcast %248 : f32 to vector<1x256xf32>
    %255 = arith.mulf %254, %250 : vector<1x256xf32>
    %256 = arith.addf %253, %255 : vector<1x256xf32>
    %257 = arith.mulf %251, %256 : vector<1x256xf32>
    %258 = arith.addf %246, %257 : vector<1x256xf32>
    %c21 = arith.constant 21 : index
    %259 = memref.load %arg2[%c21] : memref<55xf32, #tpu.memory_space<smem>>
    %c48 = arith.constant 48 : index
    %260 = memref.load %arg2[%c48] : memref<55xf32, #tpu.memory_space<smem>>
    %c193_i32 = arith.constant 193 : i32
    %261 = tpu.dynamic_rotate %7 by %c193_i32 dim 1 : vector<1x256xf32>, i32 -> vector<1x256xf32>
    %c193_i32_69 = arith.constant 193 : i32
    %262 = tpu.dynamic_rotate %9 by %c193_i32_69 dim 1 : vector<1x256xf32>, i32 -> vector<1x256xf32>
    %c21_70 = arith.constant 21 : index
    %c0_71 = arith.constant 0 : index
    %263 = vector.load %arg1[%c21_70, %c0_71] : memref<27x256xf32, #tpu.memory_space<vmem>>, vector<1x256xf32>
    %264 = vector.broadcast %259 : f32 to vector<1x256xf32>
    %265 = arith.mulf %264, %261 : vector<1x256xf32>
    %266 = vector.broadcast %260 : f32 to vector<1x256xf32>
    %267 = arith.mulf %266, %262 : vector<1x256xf32>
    %268 = arith.addf %265, %267 : vector<1x256xf32>
    %269 = arith.mulf %263, %268 : vector<1x256xf32>
    %270 = arith.addf %258, %269 : vector<1x256xf32>
    %c22 = arith.constant 22 : index
    %271 = memref.load %arg2[%c22] : memref<55xf32, #tpu.memory_space<smem>>
    %c49 = arith.constant 49 : index
    %272 = memref.load %arg2[%c49] : memref<55xf32, #tpu.memory_space<smem>>
    %c192_i32 = arith.constant 192 : i32
    %273 = tpu.dynamic_rotate %7 by %c192_i32 dim 1 : vector<1x256xf32>, i32 -> vector<1x256xf32>
    %c192_i32_72 = arith.constant 192 : i32
    %274 = tpu.dynamic_rotate %9 by %c192_i32_72 dim 1 : vector<1x256xf32>, i32 -> vector<1x256xf32>
    %c22_73 = arith.constant 22 : index
    %c0_74 = arith.constant 0 : index
    %275 = vector.load %arg1[%c22_73, %c0_74] : memref<27x256xf32, #tpu.memory_space<vmem>>, vector<1x256xf32>
    %276 = vector.broadcast %271 : f32 to vector<1x256xf32>
    %277 = arith.mulf %276, %273 : vector<1x256xf32>
    %278 = vector.broadcast %272 : f32 to vector<1x256xf32>
    %279 = arith.mulf %278, %274 : vector<1x256xf32>
    %280 = arith.addf %277, %279 : vector<1x256xf32>
    %281 = arith.mulf %275, %280 : vector<1x256xf32>
    %282 = arith.addf %270, %281 : vector<1x256xf32>
    %c23 = arith.constant 23 : index
    %283 = memref.load %arg2[%c23] : memref<55xf32, #tpu.memory_space<smem>>
    %c50 = arith.constant 50 : index
    %284 = memref.load %arg2[%c50] : memref<55xf32, #tpu.memory_space<smem>>
    %c191_i32 = arith.constant 191 : i32
    %285 = tpu.dynamic_rotate %7 by %c191_i32 dim 1 : vector<1x256xf32>, i32 -> vector<1x256xf32>
    %c191_i32_75 = arith.constant 191 : i32
    %286 = tpu.dynamic_rotate %9 by %c191_i32_75 dim 1 : vector<1x256xf32>, i32 -> vector<1x256xf32>
    %c23_76 = arith.constant 23 : index
    %c0_77 = arith.constant 0 : index
    %287 = vector.load %arg1[%c23_76, %c0_77] : memref<27x256xf32, #tpu.memory_space<vmem>>, vector<1x256xf32>
    %288 = vector.broadcast %283 : f32 to vector<1x256xf32>
    %289 = arith.mulf %288, %285 : vector<1x256xf32>
    %290 = vector.broadcast %284 : f32 to vector<1x256xf32>
    %291 = arith.mulf %290, %286 : vector<1x256xf32>
    %292 = arith.addf %289, %291 : vector<1x256xf32>
    %293 = arith.mulf %287, %292 : vector<1x256xf32>
    %294 = arith.addf %282, %293 : vector<1x256xf32>
    %c24 = arith.constant 24 : index
    %295 = memref.load %arg2[%c24] : memref<55xf32, #tpu.memory_space<smem>>
    %c51 = arith.constant 51 : index
    %296 = memref.load %arg2[%c51] : memref<55xf32, #tpu.memory_space<smem>>
    %c185_i32 = arith.constant 185 : i32
    %297 = tpu.dynamic_rotate %7 by %c185_i32 dim 1 : vector<1x256xf32>, i32 -> vector<1x256xf32>
    %c185_i32_78 = arith.constant 185 : i32
    %298 = tpu.dynamic_rotate %9 by %c185_i32_78 dim 1 : vector<1x256xf32>, i32 -> vector<1x256xf32>
    %c24_79 = arith.constant 24 : index
    %c0_80 = arith.constant 0 : index
    %299 = vector.load %arg1[%c24_79, %c0_80] : memref<27x256xf32, #tpu.memory_space<vmem>>, vector<1x256xf32>
    %300 = vector.broadcast %295 : f32 to vector<1x256xf32>
    %301 = arith.mulf %300, %297 : vector<1x256xf32>
    %302 = vector.broadcast %296 : f32 to vector<1x256xf32>
    %303 = arith.mulf %302, %298 : vector<1x256xf32>
    %304 = arith.addf %301, %303 : vector<1x256xf32>
    %305 = arith.mulf %299, %304 : vector<1x256xf32>
    %306 = arith.addf %294, %305 : vector<1x256xf32>
    %c25 = arith.constant 25 : index
    %307 = memref.load %arg2[%c25] : memref<55xf32, #tpu.memory_space<smem>>
    %c52 = arith.constant 52 : index
    %308 = memref.load %arg2[%c52] : memref<55xf32, #tpu.memory_space<smem>>
    %c184_i32 = arith.constant 184 : i32
    %309 = tpu.dynamic_rotate %7 by %c184_i32 dim 1 : vector<1x256xf32>, i32 -> vector<1x256xf32>
    %c184_i32_81 = arith.constant 184 : i32
    %310 = tpu.dynamic_rotate %9 by %c184_i32_81 dim 1 : vector<1x256xf32>, i32 -> vector<1x256xf32>
    %c25_82 = arith.constant 25 : index
    %c0_83 = arith.constant 0 : index
    %311 = vector.load %arg1[%c25_82, %c0_83] : memref<27x256xf32, #tpu.memory_space<vmem>>, vector<1x256xf32>
    %312 = vector.broadcast %307 : f32 to vector<1x256xf32>
    %313 = arith.mulf %312, %309 : vector<1x256xf32>
    %314 = vector.broadcast %308 : f32 to vector<1x256xf32>
    %315 = arith.mulf %314, %310 : vector<1x256xf32>
    %316 = arith.addf %313, %315 : vector<1x256xf32>
    %317 = arith.mulf %311, %316 : vector<1x256xf32>
    %318 = arith.addf %306, %317 : vector<1x256xf32>
    %c26 = arith.constant 26 : index
    %319 = memref.load %arg2[%c26] : memref<55xf32, #tpu.memory_space<smem>>
    %c53 = arith.constant 53 : index
    %320 = memref.load %arg2[%c53] : memref<55xf32, #tpu.memory_space<smem>>
    %c183_i32 = arith.constant 183 : i32
    %321 = tpu.dynamic_rotate %7 by %c183_i32 dim 1 : vector<1x256xf32>, i32 -> vector<1x256xf32>
    %c183_i32_84 = arith.constant 183 : i32
    %322 = tpu.dynamic_rotate %9 by %c183_i32_84 dim 1 : vector<1x256xf32>, i32 -> vector<1x256xf32>
    %c26_85 = arith.constant 26 : index
    %c0_86 = arith.constant 0 : index
    %323 = vector.load %arg1[%c26_85, %c0_86] : memref<27x256xf32, #tpu.memory_space<vmem>>, vector<1x256xf32>
    %324 = vector.broadcast %319 : f32 to vector<1x256xf32>
    %325 = arith.mulf %324, %321 : vector<1x256xf32>
    %326 = vector.broadcast %320 : f32 to vector<1x256xf32>
    %327 = arith.mulf %326, %322 : vector<1x256xf32>
    %328 = arith.addf %325, %327 : vector<1x256xf32>
    %329 = arith.mulf %323, %328 : vector<1x256xf32>
    %330 = arith.addf %318, %329 : vector<1x256xf32>
    %c54 = arith.constant 54 : index
    %331 = memref.load %arg2[%c54] : memref<55xf32, #tpu.memory_space<smem>>
    %332 = vector.broadcast %331 : f32 to vector<1x256xf32>
    %333 = arith.addf %330, %332 : vector<1x256xf32>
    %cst_87 = arith.constant 0.000000e+00 : f32
    %334 = vector.broadcast %cst_87 : f32 to vector<1x256xf32>
    %335 = arith.maximumf %333, %334 : vector<1x256xf32>
    %336 = arith.negf %335 : vector<1x256xf32>
    %337 = math.exp %336 : vector<1x256xf32>
    %cst_88 = arith.constant 1.000000e+00 : f32
    %338 = vector.broadcast %cst_88 : f32 to vector<1x256xf32>
    %339 = arith.addf %338, %337 : vector<1x256xf32>
    %340 = arith.divf %338, %339 : vector<1x256xf32>
    %341 = vector.broadcast %340 : vector<1x256xf32> to vector<32x256xf32>
    %342 = arith.mulf %1, %341 : vector<32x256xf32>
    %cst_89 = arith.constant 1.000000e+00 : f32
    %343 = vector.broadcast %cst_89 : f32 to vector<1x256xf32>
    %344 = arith.subf %343, %340 : vector<1x256xf32>
    %345 = vector.broadcast %344 : vector<1x256xf32> to vector<32x256xf32>
    %346 = arith.mulf %3, %345 : vector<32x256xf32>
    %347 = arith.addf %342, %346 : vector<32x256xf32>
    %c0_90 = arith.constant 0 : index
    %c0_91 = arith.constant 0 : index
    %c0_92 = arith.constant 0 : index
    %348 = vector.load %arg5[%c0_90, %c0_91, %c0_92] : memref<1x32x256xf32, #tpu.memory_space<vmem>>, vector<1x32x256xf32>
    %349 = vector.shape_cast %348 : vector<1x32x256xf32> to vector<32x256xf32>
    %350 = vector.shape_cast %347 : vector<32x256xf32> to vector<1x32x256xf32>
    tpu.vector_store %arg5[%c0_90, %c0_91, %c0_92], %350 {strides = array<i32>} : memref<1x32x256xf32, #tpu.memory_space<vmem>>, vector<1x32x256xf32>,
    return
  }
  func.func @transform_0(%arg0: i32) -> (i32, i32) {
    %c0_i32 = arith.constant 0 : i32
    %c0_i32_0 = arith.constant 0 : i32
    %c0_i32_1 = arith.constant 0 : i32
    return %c0_i32, %c0_i32_0 : i32, i32
  }
  func.func @transform_1(%arg0: i32) -> i32 {
    %c0_i32 = arith.constant 0 : i32
    %c0_i32_0 = arith.constant 0 : i32
    return %c0_i32 : i32
  }
  func.func @transform_2(%arg0: i32) -> (i32, i32, i32) {
    %c0_i32 = arith.constant 0 : i32
    %c0_i32_0 = arith.constant 0 : i32
    %c0_i32_1 = arith.constant 0 : i32
    return %arg0, %c0_i32, %c0_i32_0 : i32, i32, i32
  }
  func.func @transform_3(%arg0: i32) -> (i32, i32, i32) {
    %c0_i32 = arith.constant 0 : i32
    %c0_i32_0 = arith.constant 0 : i32
    %c0_i32_1 = arith.constant 0 : i32
    return %arg0, %c0_i32, %c0_i32_0 : i32, i32, i32
  }
  func.func @transform_4(%arg0: i32) -> (i32, i32, i32) {
    %c0_i32 = arith.constant 0 : i32
    %c0_i32_0 = arith.constant 0 : i32
    %c0_i32_1 = arith.constant 0 : i32
    return %arg0, %c0_i32, %c0_i32_0 : i32, i32, i32
  }
}

</mosaic_0001>

<llo_original>
// kernel: tpu_custom_call.1
$region0: #{tpu_custom_call.1}
  #allocation0 [shape = 'u32[]', space=smem, size = 0x4, offset = 0x4, fixed_abs, tag = 'smem constant byte address 0x4 - core index']
  #allocation1 [shape = 'u32[144,128]{1,0:T(1,128)}', space=vmem, size = 0x12000, scoped, tag = 'internal scratch']
  %s0 = inlined_call_operand.hbm [shape: f32[27,256], index: 0, kind: input, shape index: {}]
  %s1 = inlined_call_operand.hbm [shape: f32[55], index: 1, kind: input, shape index: {}]
  %s2 = inlined_call_operand.hbm [shape: f32[2,32,256], index: 2, kind: input, shape index: {}]
  %s3 = inlined_call_operand.hbm [shape: f32[2,32,256], index: 3, kind: input, shape index: {}]
  %s4 = inlined_call_operand.hbm [shape: f32[2,32,256], index: 4, kind: output, shape index: {}]
  %s5 = sld [smem:[#allocation0]]
  $region65: #{tpu_custom_call.1} parent=0
    _
  %s7 = ssub.s32 1, %s5
  %s8 = scalar_select 0, %s7, %s5
  $region1: #{tpu_custom_call.1} parent=0
    #allocation2 [shape = 'u8[32768]{0}', space=vmem, size = 0x8000, scoped, tag = 'input window, operand 0, single buffered']
    #allocation3 [shape = 's32[2]{0}', space=sflag, size = 0x8, scoped, tag = 'scoped memory for tpu_custom_call.1']
    #allocation4 [shape = 's32[2]{0}', space=sflag, size = 0x8, scoped, tag = 'scoped memory for tpu_custom_call.1']
    #allocation5 [shape = 's32[2]{0}', space=sflag, size = 0x8, scoped, tag = 'scoped memory for tpu_custom_call.1']
    #allocation6 [shape = 'u8[512]{0}', space=smem, size = 0x200, scoped, tag = 'input window, operand 1, single buffered']
    #allocation7 [shape = 'u8[65536]{0}', space=vmem, size = 0x10000, scoped, tag = 'input window, operand 2']
    #allocation8 [shape = 's32[2]{0}', space=sflag, size = 0x8, scoped, tag = 'scoped memory for tpu_custom_call.1']
    #allocation9 [shape = 'u8[65536]{0}', space=vmem, size = 0x10000, scoped, tag = 'input window, operand 3']
    #allocation10 [shape = 'u8[65536]{0}', space=vmem, size = 0x10000, scoped, tag = 'output window, operand 0']
    %9 = vsyncpa [#allocation3], 0
    %10 = vsyncpa [#allocation5], 0
    %11 = vsyncpa [#allocation8], 0
    %s12 = scalar_lea.sflag [#allocation8], 1
    %13 = vsyncpa %s12, 0
    %14 = vsyncpa [#allocation4], 0
    %s15 = scalar_lea.sflag [#allocation4], 1
    %16 = vsyncpa %s15, 0
    loop: start=0, step=1, limit=4
    $region2: #{tpu_custom_call.1} parent=1 // loop_pre_header
      _
    $region3: #{tpu_custom_call.1} parent=1 // loop_header
      %s18 = sphi 0, %s22
      %p19 = scmp.ge.s32.totalorder %s18, 4
      %s26 = sphi 0, %s26
      %s28 = sphi 0, %s26
      %s29 = sphi 0, %s28
      %s43 = sphi 0, %s29
      %s47 = sphi 0, %s47
      %s49 = sphi 0, %s47
      %s50 = sphi 0, %s49
      %s64 = sphi 0, %s50
      %s70 = sphi 0, %s72
      %s73 = sphi 0, %s70
      %s74 = sphi 0, %s73
      %s90 = sphi 0, %s74
      %s96 = sphi 0, %s98
      %s99 = sphi 0, %s96
      %s100 = sphi 0, %s99
      %s116 = sphi 0, %s100
      %s122 = sphi 0, %s124
      %s125 = sphi 0, %s122
      %s126 = sphi 0, %s125
      %s142 = sphi 0, %s126
    $region4: #{tpu_custom_call.1} parent=1 // loop_header_branch
      %21 = sbr.rel (%p19) target = $region8
    $region5: #{tpu_custom_call.1} parent=1 // loop_body
      %s23 = ssub.s32 %s18, 1
      %s24 = ssub.s32 %s18, 2
      %s25 = sadd.s32 %s18, 1
      %s27 = sadd.s32 %s26, 1
      %p30 = scmp.eq.s32.totalorder %s18, 1
      %p31 = scmp.ne.s32.totalorder %s26, %s28
      %p32 = scmp.eq.s32.totalorder %s18, 0
      %p33 = por %p31, %p32
      %p34 = scmp.ne.s32.totalorder %s26, %s28
      %p35 = scmp.eq.s32.totalorder %s23, 1
      %p36 = por %p34, %p35
      %p37 = scmp.ne.s32.totalorder %s28, %s29
      %p38 = scmp.eq.s32.totalorder %s23, 0
      %p39 = por %p37, %p38
      %p40 = scmp.ne.s32.totalorder %s28, %s29
      %p41 = scmp.eq.s32.totalorder %s24, 1
      %p42 = por %p40, %p41
      %p44 = scmp.ne.s32.totalorder %s29, %s43
      %p45 = scmp.eq.s32.totalorder %s24, 0
      %p46 = por %p44, %p45
      %s48 = sadd.s32 %s47, 1
      %p51 = scmp.eq.s32.totalorder %s18, 1
      %p52 = scmp.ne.s32.totalorder %s47, %s49
      %p53 = scmp.eq.s32.totalorder %s18, 0
      %p54 = por %p52, %p53
      %p55 = scmp.ne.s32.totalorder %s47, %s49
      %p56 = scmp.eq.s32.totalorder %s23, 1
      %p57 = por %p55, %p56
      %p58 = scmp.ne.s32.totalorder %s49, %s50
      %p59 = scmp.eq.s32.totalorder %s23, 0
      %p60 = por %p58, %p59
      %p61 = scmp.ne.s32.totalorder %s49, %s50
      %p62 = scmp.eq.s32.totalorder %s24, 1
      %p63 = por %p61, %p62
      %p65 = scmp.ne.s32.totalorder %s50, %s64
      %p66 = scmp.eq.s32.totalorder %s24, 0
      %p67 = por %p65, %p66
      %s68 = ssub.s32 %s18, %s25
      %p69 = scmp.eq.s32.totalorder %s68, 0
      %s71 = sadd.s32 %s70, 1
      %s72 = scalar_select %p69, %s70, %s71
      %p75 = pneg %p69
      %p76 = scmp.eq.s32.totalorder %s18, 1
      %p77 = por %p75, %p76
      %p78 = scmp.ne.s32.totalorder %s70, %s73
      %p79 = scmp.eq.s32.totalorder %s18, 0
      %p80 = por %p78, %p79
      %p81 = scmp.ne.s32.totalorder %s70, %s73
      %p82 = scmp.eq.s32.totalorder %s23, 1
      %p83 = por %p81, %p82
      %p84 = scmp.ne.s32.totalorder %s73, %s74
      %p85 = scmp.eq.s32.totalorder %s23, 0
      %p86 = por %p84, %p85
      %p87 = scmp.ne.s32.totalorder %s73, %s74
      %p88 = scmp.eq.s32.totalorder %s24, 1
      %p89 = por %p87, %p88
      %p91 = scmp.ne.s32.totalorder %s74, %s90
      %p92 = scmp.eq.s32.totalorder %s24, 0
      %p93 = por %p91, %p92
      %s94 = ssub.s32 %s18, %s25
      %p95 = scmp.eq.s32.totalorder %s94, 0
      %s97 = sadd.s32 %s96, 1
      %s98 = scalar_select %p95, %s96, %s97
      %p101 = pneg %p95
      %p102 = scmp.eq.s32.totalorder %s18, 1
      %p103 = por %p101, %p102
      %p104 = scmp.ne.s32.totalorder %s96, %s99
      %p105 = scmp.eq.s32.totalorder %s18, 0
      %p106 = por %p104, %p105
      %p107 = scmp.ne.s32.totalorder %s96, %s99
      %p108 = scmp.eq.s32.totalorder %s23, 1
      %p109 = por %p107, %p108
      %p110 = scmp.ne.s32.totalorder %s99, %s100
      %p111 = scmp.eq.s32.totalorder %s23, 0
      %p112 = por %p110, %p111
      %p113 = scmp.ne.s32.totalorder %s99, %s100
      %p114 = scmp.eq.s32.totalorder %s24, 1
      %p115 = por %p113, %p114
      %p117 = scmp.ne.s32.totalorder %s100, %s116
      %p118 = scmp.eq.s32.totalorder %s24, 0
      %p119 = por %p117, %p118
      %s120 = ssub.s32 %s18, %s25
      %p121 = scmp.eq.s32.totalorder %s120, 0
      %s123 = sadd.s32 %s122, 1
      %s124 = scalar_select %p121, %s122, %s123
      %p127 = pneg %p121
      %p128 = scmp.eq.s32.totalorder %s18, 1
      %p129 = por %p127, %p128
      %p130 = scmp.ne.s32.totalorder %s122, %s125
      %p131 = scmp.eq.s32.totalorder %s18, 0
      %p132 = por %p130, %p131
      %p133 = scmp.ne.s32.totalorder %s122, %s125
      %p134 = scmp.eq.s32.totalorder %s23, 1
      %p135 = por %p133, %p134
      %p136 = scmp.ne.s32.totalorder %s125, %s126
      %p137 = scmp.eq.s32.totalorder %s23, 0
      %p138 = por %p136, %p137
      %p139 = scmp.ne.s32.totalorder %s125, %s126
      %p140 = scmp.eq.s32.totalorder %s24, 1
      %p141 = por %p139, %p140
      %p143 = scmp.ne.s32.totalorder %s126, %s142
      %p144 = scmp.eq.s32.totalorder %s24, 0
      %p145 = por %p143, %p144
      %p146 = scmp.le.s32.totalorder 1, %s18
      %p147 = scmp.lt.s32.totalorder %s18, 3
      %p148 = pnand %p146, %p147
      %p149 = pneg %p148
      // Predicated region
      $region9: #{tpu_custom_call.1} parent=5 // pred_check
        _
      $region10: #{tpu_custom_call.1} parent=5 // pred_check_branch
        %151 = sbr.rel (%p148) target = $region12
      $region11: #{tpu_custom_call.1} parent=5 // pred_region
        %s152 = ssub.s32 %s18, 1
        // Predicated region
        $region13: #{tpu_custom_call.1} parent=11 // pred_check
          %p153 = pneg %p39
        $region14: #{tpu_custom_call.1} parent=11 // pred_check_branch
          %155 = sbr.rel (%p153) target = $region16
        $region15: #{tpu_custom_call.1} parent=11 // pred_region
          %s157 = ssub.s32 1024, 1024
          %158 = vsyncadd [#allocation3], %s157
          %s159 = sshll.u32 [#allocation2], 4
          %s160 = int_to_ptr.vmem [resolvable:$true] %s159
          %165 = dma.hbm_to_vmem [thread:$0]  %s0, 1024, %s160, [#allocation3], 256, 256, 16
        $region16: #{tpu_custom_call.1} parent=11 // pred_fallthru
          _
        // Predicated region
        $region17: #{tpu_custom_call.1} parent=11 // pred_check
          %p166 = pneg %p60
        $region18: #{tpu_custom_call.1} parent=11 // pred_check_branch
          %168 = sbr.rel (%p166) target = $region20
        $region19: #{tpu_custom_call.1} parent=11 // pred_region
          %s170 = ssub.s32 16, 16
          %171 = vsyncadd [#allocation5], %s170
          %174 = dma.hbm_to_smem %s1, 16, [#allocation6], [#allocation5]
        $region20: #{tpu_custom_call.1} parent=11 // pred_fallthru
          _
      $region12: #{tpu_custom_call.1} parent=5 // pred_fallthru
        _
      %p175 = scmp.lt.s32.totalorder %s18, 2
      // Predicated region
      $region21: #{tpu_custom_call.1} parent=5 // pred_check
        %p176 = pneg %p175
      $region22: #{tpu_custom_call.1} parent=5 // pred_check_branch
        %178 = sbr.rel (%p176) target = $region24
      $region23: #{tpu_custom_call.1} parent=5 // pred_region
        // Predicated region
        $region25: #{tpu_custom_call.1} parent=23 // pred_check
          %p179 = pneg %p80
        $region26: #{tpu_custom_call.1} parent=23 // pred_check_branch
          %181 = sbr.rel (%p179) target = $region28
        $region27: #{tpu_custom_call.1} parent=23 // pred_region
          %s182 = sand.u32 %s18, 1
          %s183 = scalar_lea.sflag [#allocation8], %s182
          %s184 = sand.u32 %s70, 1
          %s185 = smul.addr %s184, 64
          %s186 = scalar_lea.vmem [#allocation7], %s185
          %s188 = ssub.s32 1024, 1024
          %189 = vsyncadd %s183, %s188
          %s190 = smul.addr %s18, 8
          %s191 = smul.addr %s190, 128
          %s192 = scalar_lea.hbm %s2, %s191
          %s193 = sshll.u32 %s186, 4
          %s194 = int_to_ptr.vmem [resolvable:$true] %s193
          %199 = dma.hbm_to_vmem [thread:$0]  %s192, 1024, %s194, %s183, 256, 256, 16
        $region28: #{tpu_custom_call.1} parent=23 // pred_fallthru
          _
        // Predicated region
        $region29: #{tpu_custom_call.1} parent=23 // pred_check
          %p200 = pneg %p106
        $region30: #{tpu_custom_call.1} parent=23 // pred_check_branch
          %202 = sbr.rel (%p200) target = $region32
        $region31: #{tpu_custom_call.1} parent=23 // pred_region
          %s203 = sand.u32 %s18, 1
          %s204 = scalar_lea.sflag [#allocation8], %s203
          %s205 = sand.u32 %s96, 1
          %s206 = smul.addr %s205, 64
          %s207 = scalar_lea.vmem [#allocation9], %s206
          %s209 = ssub.s32 1024, 1024
          %210 = vsyncadd %s204, %s209
          %s211 = smul.addr %s18, 8
          %s212 = smul.addr %s211, 128
          %s213 = scalar_lea.hbm %s3, %s212
          %s214 = sshll.u32 %s207, 4
          %s215 = int_to_ptr.vmem [resolvable:$true] %s214
          %220 = dma.hbm_to_vmem [thread:$0]  %s213, 1024, %s215, %s204, 256, 256, 16
        $region32: #{tpu_custom_call.1} parent=23 // pred_fallthru
          _
      $region24: #{tpu_custom_call.1} parent=5 // pred_fallthru
        _
      %p221 = scmp.le.s32.totalorder 1, %s18
      %p222 = scmp.lt.s32.totalorder %s18, 3
      %p223 = pnand %p221, %p222
      %p224 = pneg %p223
      // Predicated region
      $region33: #{tpu_custom_call.1} parent=5 // pred_check
        _
      $region34: #{tpu_custom_call.1} parent=5 // pred_check_branch
        %226 = sbr.rel (%p223) target = $region36
      $region35: #{tpu_custom_call.1} parent=5 // pred_region
        %s227 = ssub.s32 %s18, 1
        // Predicated region
        $region37: #{tpu_custom_call.1} parent=35 // pred_check
          %p228 = pneg %p39
        $region38: #{tpu_custom_call.1} parent=35 // pred_check_branch
          %230 = sbr.rel (%p228) target = $region40
        $region39: #{tpu_custom_call.1} parent=35 // pred_region
          %231 = dma.done [#allocation3], 1024
        $region40: #{tpu_custom_call.1} parent=35 // pred_fallthru
          _
        // Predicated region
        $region41: #{tpu_custom_call.1} parent=35 // pred_check
          %p232 = pneg %p60
        $region42: #{tpu_custom_call.1} parent=35 // pred_check_branch
          %234 = sbr.rel (%p232) target = $region44
        $region43: #{tpu_custom_call.1} parent=35 // pred_region
          %235 = dma.done [#allocation5], 16
        $region44: #{tpu_custom_call.1} parent=35 // pred_fallthru
          _
        %s236 = sand.u32 %s23, 1
        %s237 = scalar_lea.sflag [#allocation8], %s236
        %s238 = sand.u32 %s73, 1
        %s239 = smul.addr %s238, 64
        %s240 = scalar_lea.vmem [#allocation7], %s239
        // Predicated region
        $region45: #{tpu_custom_call.1} parent=35 // pred_check
          %p241 = pneg %p86
        $region46: #{tpu_custom_call.1} parent=35 // pred_check_branch
          %243 = sbr.rel (%p241) target = $region48
        $region47: #{tpu_custom_call.1} parent=35 // pred_region
          %244 = dma.done %s237, 1024
        $region48: #{tpu_custom_call.1} parent=35 // pred_fallthru
          _
        %s245 = sand.u32 %s23, 1
        %s246 = scalar_lea.sflag [#allocation8], %s245
        %s247 = sand.u32 %s99, 1
        %s248 = smul.addr %s247, 64
        %s249 = scalar_lea.vmem [#allocation9], %s248
        // Predicated region
        $region49: #{tpu_custom_call.1} parent=35 // pred_check
          %p250 = pneg %p112
        $region50: #{tpu_custom_call.1} parent=35 // pred_check_branch
          %252 = sbr.rel (%p250) target = $region52
        $region51: #{tpu_custom_call.1} parent=35 // pred_region
          %253 = dma.done %s246, 1024
        $region52: #{tpu_custom_call.1} parent=35 // pred_fallthru
          _
        %254 = sfence
        %p255 = pneg %p39
        %p256 = pneg %p36
        %p257 = pneg %p60
        %p258 = pneg %p57
        %s259 = sand.u32 %s23, 1
        %s260 = scalar_lea.sflag [#allocation8], %s259
        %s261 = sand.u32 %s73, 1
        %s262 = smul.addr %s261, 64
        %s263 = scalar_lea.vmem [#allocation7], %s262
        %p264 = pneg %p86
        %p265 = pneg %p83
        %s266 = sand.u32 %s23, 1
        %s267 = scalar_lea.sflag [#allocation8], %s266
        %s268 = sand.u32 %s99, 1
        %s269 = smul.addr %s268, 64
        %s270 = scalar_lea.vmem [#allocation9], %s269
        %p271 = pneg %p112
        %p272 = pneg %p109
        %p273 = pneg %p138
        %p274 = pneg %p135
        %s275 = sand.u32 %s125, 1
        %s276 = scalar_lea.sflag [#allocation4], %s275
        %s277 = sand.u32 %s125, 1
        %s278 = smul.addr %s277, 64
        %s279 = scalar_lea.vmem [#allocation10], %s278
        %v280 = vld [vmem:[%s240] sm:$0xff]
        %v281 = vld [vmem:[%s240 + $0x8] sm:$0xff]
        %v282 = vld [vmem:[%s240 + $0x10] sm:$0xff]
        %v283 = vld [vmem:[%s240 + $0x18] sm:$0xff]
        %v284 = vld [vmem:[%s240 + $0x20] sm:$0xff]
        %v285 = vld [vmem:[%s240 + $0x28] sm:$0xff]
        %v286 = vld [vmem:[%s240 + $0x30] sm:$0xff]
        %v287 = vld [vmem:[%s240 + $0x38] sm:$0xff]
        %v288 = vld [vmem:[%s249] sm:$0xff]
        %v289 = vld [vmem:[%s249 + $0x8] sm:$0xff]
        %v290 = vld [vmem:[%s249 + $0x10] sm:$0xff]
        %v291 = vld [vmem:[%s249 + $0x18] sm:$0xff]
        %v292 = vld [vmem:[%s249 + $0x20] sm:$0xff]
        %v293 = vld [vmem:[%s249 + $0x28] sm:$0xff]
        %v294 = vld [vmem:[%s249 + $0x30] sm:$0xff]
        %v295 = vld [vmem:[%s249 + $0x38] sm:$0xff]
        %v296 = vadd.f32 %v280, %v282
        %v297 = vadd.f32 %v296, %v284
        %v298 = vadd.f32 %v297, %v286
        %v299 = vrot.slane %v298, 4
        %v300 = vadd.f32 %v298, %v299
        %v301 = vrot.slane %v300, 2
        %v302 = vadd.f32 %v300, %v301
        %v303 = vrot.slane %v302, 1
        %v304 = vadd.f32 %v302, %v303
        %v305 = vadd.f32 %v281, %v283
        %v306 = vadd.f32 %v305, %v285
        %v307 = vadd.f32 %v306, %v287
        %v308 = vrot.slane %v307, 4
        %v309 = vadd.f32 %v307, %v308
        %v310 = vrot.slane %v309, 2
        %v311 = vadd.f32 %v309, %v310
        %v312 = vrot.slane %v311, 1
        %v313 = vadd.f32 %v311, %v312
        %v314 = vrcp.pop 32.0
        %v315 = vmul.f32 %v304, %v314
        %v316 = vmul.f32 %v313, %v314
        %v317 = vmax.f32 %v280, %v284
        %v318 = vmax.f32 %v282, %v286
        %v319 = vmax.f32 %v317, %v318
        %v320 = vrot.slane %v319, 4
        %v321 = vmax.f32 %v319, %v320
        %v322 = vrot.slane %v321, 2
        %v323 = vmax.f32 %v321, %v322
        %v324 = vrot.slane %v323, 1
        %v325 = vmax.f32 %v323, %v324
        %v326 = vmax.f32 %v281, %v285
        %v327 = vmax.f32 %v283, %v287
        %v328 = vmax.f32 %v326, %v327
        %v329 = vrot.slane %v328, 4
        %v330 = vmax.f32 %v328, %v329
        %v331 = vrot.slane %v330, 2
        %v332 = vmax.f32 %v330, %v331
        %v333 = vrot.slane %v332, 1
        %v334 = vmax.f32 %v332, %v333
        %s335 = sld [smem:[#allocation6]]
        %s336 = sld [smem:[#allocation6 + $0x1b]]
        %337 = vrot.lane.b32.xlu0 %v315, 73
        %v338 = vpop.permute.xlu0 %337
        %339 = vrot.lane.b32.xlu0 %v316, 73
        %v340 = vpop.permute.xlu0 %339
        %v341 = vlaneseq
        %v342 = vand.u32 %v341, 127
        %vm343 = vcmp.lt.s32.totalorder %v342, 73
        %v344 = vsel %vm343, %v338, %v340
        %v345 = vsel %vm343, %v340, %v338
        %346 = vrot.lane.b32.xlu0 %v325, 73
        %v347 = vpop.permute.xlu0 %346
        %348 = vrot.lane.b32.xlu0 %v334, 73
        %v349 = vpop.permute.xlu0 %348
        %v350 = vsel %vm343, %v347, %v349
        %v351 = vsel %vm343, %v349, %v347
        %v352 = vld [vmem:[#allocation2] ss:$8 sm:$0x3]
        %v353 = vstv %s335
        %v354 = vmul.f32 %v353, %v345
        %v355 = vmul.f32 %v353, %v344
        %v356 = vstv %s336
        %v357 = vmul.f32 %v356, %v351
        %v358 = vmul.f32 %v356, %v350
        %v359 = vadd.f32 %v354, %v357
        %v360 = vadd.f32 %v355, %v358
        %v363 = vcombine.low %v359, %v360
        %v365 = vunpack.c.l.s4 1966171168
        %v366 = vunpack.c.0.s8 %v365
        %v367 = vlaneseq
        %v368 = vshrl.u32 %v367, 7
        %v369 = vsub.s32 %v366, %v368
        %v370 = vrot.slane %v363, %v369
        %v372 = vunpack.c.l.s4 1966171168
        %v373 = vunpack.c.0.s8 %v372
        %v374 = vlaneseq
        %v375 = vshrl.u32 %v374, 7
        %v376 = vsub.s32 %v373, %v375
        %v377 = vrot.slane %v370, %v376
        %v379 = vmul.f32 %v352, %v377
        %v380 = vadd.f32 %v379, 0.0
        %s381 = sld [smem:[#allocation6 + $0x1]]
        %s382 = sld [smem:[#allocation6 + $0x1c]]
        %383 = vrot.lane.b32.xlu0 %v315, 72
        %v384 = vpop.permute.xlu0 %383
        %385 = vrot.lane.b32.xlu0 %v316, 72
        %v386 = vpop.permute.xlu0 %385
        %vm387 = vcmp.lt.s32.totalorder %v342, 72
        %v388 = vsel %vm387, %v384, %v386
        %v389 = vsel %vm387, %v386, %v384
        %390 = vrot.lane.b32.xlu0 %v325, 72
        %v391 = vpop.permute.xlu0 %390
        %392 = vrot.lane.b32.xlu0 %v334, 72
        %v393 = vpop.permute.xlu0 %392
        %v394 = vsel %vm387, %v391, %v393
        %v395 = vsel %vm387, %v393, %v391
        %s396 = scalar_lea.vmem [#allocation2], 1
        %v397 = vld [vmem:[%s396] ss:$8 sm:$0x3]
        %v398 = vstv %s381
        %v399 = vmul.f32 %v398, %v389
        %v400 = vmul.f32 %v398, %v388
        %v401 = vstv %s382
        %v402 = vmul.f32 %v401, %v395
        %v403 = vmul.f32 %v401, %v394
        %v404 = vadd.f32 %v399, %v402
        %v405 = vadd.f32 %v400, %v403
        %v408 = vcombine.low %v404, %v405
        %v410 = vunpack.c.l.s4 1966171168
        %v411 = vunpack.c.0.s8 %v410
        %v412 = vlaneseq
        %v413 = vshrl.u32 %v412, 7
        %v414 = vsub.s32 %v411, %v413
        %v415 = vrot.slane %v408, %v414
        %v417 = vunpack.c.l.s4 1966171168
        %v418 = vunpack.c.0.s8 %v417
        %v419 = vlaneseq
        %v420 = vshrl.u32 %v419, 7
        %v421 = vsub.s32 %v418, %v420
        %v422 = vrot.slane %v415, %v421
        %v424 = vmul.f32 %v397, %v422
        %v425 = vadd.f32 %v380, %v424
        %s426 = sld [smem:[#allocation6 + $0x2]]
        %s427 = sld [smem:[#allocation6 + $0x1d]]
        %428 = vrot.lane.b32.xlu0 %v315, 71
        %v429 = vpop.permute.xlu0 %428
        %430 = vrot.lane.b32.xlu0 %v316, 71
        %v431 = vpop.permute.xlu0 %430
        %vm432 = vcmp.lt.s32.totalorder %v342, 71
        %v433 = vsel %vm432, %v429, %v431
        %v434 = vsel %vm432, %v431, %v429
        %435 = vrot.lane.b32.xlu0 %v325, 71
        %v436 = vpop.permute.xlu0 %435
        %437 = vrot.lane.b32.xlu0 %v334, 71
        %v438 = vpop.permute.xlu0 %437
        %v439 = vsel %vm432, %v436, %v438
        %v440 = vsel %vm432, %v438, %v436
        %s441 = scalar_lea.vmem [#allocation2], 2
        %v442 = vld [vmem:[%s441] ss:$8 sm:$0x3]
        %v443 = vstv %s426
        %v444 = vmul.f32 %v443, %v434
        %v445 = vmul.f32 %v443, %v433
        %v446 = vstv %s427
        %v447 = vmul.f32 %v446, %v440
        %v448 = vmul.f32 %v446, %v439
        %v449 = vadd.f32 %v444, %v447
        %v450 = vadd.f32 %v445, %v448
        %v453 = vcombine.low %v449, %v450
        %v455 = vunpack.c.l.s4 1966171168
        %v456 = vunpack.c.0.s8 %v455
        %v457 = vlaneseq
        %v458 = vshrl.u32 %v457, 7
        %v459 = vsub.s32 %v456, %v458
        %v460 = vrot.slane %v453, %v459
        %v462 = vunpack.c.l.s4 1966171168
        %v463 = vunpack.c.0.s8 %v462
        %v464 = vlaneseq
        %v465 = vshrl.u32 %v464, 7
        %v466 = vsub.s32 %v463, %v465
        %v467 = vrot.slane %v460, %v466
        %v469 = vmul.f32 %v442, %v467
        %v470 = vadd.f32 %v425, %v469
        %s471 = sld [smem:[#allocation6 + $0x3]]
        %s472 = sld [smem:[#allocation6 + $0x1e]]
        %473 = vrot.lane.b32.xlu0 %v315, 65
        %v474 = vpop.permute.xlu0 %473
        %475 = vrot.lane.b32.xlu0 %v316, 65
        %v476 = vpop.permute.xlu0 %475
        %vm477 = vcmp.lt.s32.totalorder %v342, 65
        %v478 = vsel %vm477, %v474, %v476
        %v479 = vsel %vm477, %v476, %v474
        %480 = vrot.lane.b32.xlu0 %v325, 65
        %v481 = vpop.permute.xlu0 %480
        %482 = vrot.lane.b32.xlu0 %v334, 65
        %v483 = vpop.permute.xlu0 %482
        %v484 = vsel %vm477, %v481, %v483
        %v485 = vsel %vm477, %v483, %v481
        %s486 = scalar_lea.vmem [#allocation2], 3
        %v487 = vld [vmem:[%s486] ss:$8 sm:$0x3]
        %v488 = vstv %s471
        %v489 = vmul.f32 %v488, %v479
        %v490 = vmul.f32 %v488, %v478
        %v491 = vstv %s472
        %v492 = vmul.f32 %v491, %v485
        %v493 = vmul.f32 %v491, %v484
        %v494 = vadd.f32 %v489, %v492
        %v495 = vadd.f32 %v490, %v493
        %v498 = vcombine.low %v494, %v495
        %v500 = vunpack.c.l.s4 1966171168
        %v501 = vunpack.c.0.s8 %v500
        %v502 = vlaneseq
        %v503 = vshrl.u32 %v502, 7
        %v504 = vsub.s32 %v501, %v503
        %v505 = vrot.slane %v498, %v504
        %v507 = vunpack.c.l.s4 1966171168
        %v508 = vunpack.c.0.s8 %v507
        %v509 = vlaneseq
        %v510 = vshrl.u32 %v509, 7
        %v511 = vsub.s32 %v508, %v510
        %v512 = vrot.slane %v505, %v511
        %v514 = vmul.f32 %v487, %v512
        %v515 = vadd.f32 %v470, %v514
        %s516 = sld [smem:[#allocation6 + $0x4]]
        %s517 = sld [smem:[#allocation6 + $0x1f]]
        %518 = vrot.lane.b32.xlu0 %v315, 64
        %v519 = vpop.permute.xlu0 %518
        %520 = vrot.lane.b32.xlu0 %v316, 64
        %v521 = vpop.permute.xlu0 %520
        %vm522 = vcmp.lt.s32.totalorder %v342, 64
        %v523 = vsel %vm522, %v519, %v521
        %v524 = vsel %vm522, %v521, %v519
        %525 = vrot.lane.b32.xlu0 %v325, 64
        %v526 = vpop.permute.xlu0 %525
        %527 = vrot.lane.b32.xlu0 %v334, 64
        %v528 = vpop.permute.xlu0 %527
        %v529 = vsel %vm522, %v526, %v528
        %v530 = vsel %vm522, %v528, %v526
        %s531 = scalar_lea.vmem [#allocation2], 4
        %v532 = vld [vmem:[%s531] ss:$8 sm:$0x3]
        %v533 = vstv %s516
        %v534 = vmul.f32 %v533, %v524
        %v535 = vmul.f32 %v533, %v523
        %v536 = vstv %s517
        %v537 = vmul.f32 %v536, %v530
        %v538 = vmul.f32 %v536, %v529
        %v539 = vadd.f32 %v534, %v537
        %v540 = vadd.f32 %v535, %v538
        %v543 = vcombine.low %v539, %v540
        %v545 = vunpack.c.l.s4 1966171168
        %v546 = vunpack.c.0.s8 %v545
        %v547 = vlaneseq
        %v548 = vshrl.u32 %v547, 7
        %v549 = vsub.s32 %v546, %v548
        %v550 = vrot.slane %v543, %v549
        %v552 = vunpack.c.l.s4 1966171168
        %v553 = vunpack.c.0.s8 %v552
        %v554 = vlaneseq
        %v555 = vshrl.u32 %v554, 7
        %v556 = vsub.s32 %v553, %v555
        %v557 = vrot.slane %v550, %v556
        %v559 = vmul.f32 %v532, %v557
        %v560 = vadd.f32 %v515, %v559
        %s561 = sld [smem:[#allocation6 + $0x5]]
        %s562 = sld [smem:[#allocation6 + $0x20]]
        %563 = vrot.lane.b32.xlu0 %v315, 63
        %v564 = vpop.permute.xlu0 %563
        %565 = vrot.lane.b32.xlu0 %v316, 63
        %v566 = vpop.permute.xlu0 %565
        %vm567 = vcmp.lt.s32.totalorder %v342, 63
        %v568 = vsel %vm567, %v564, %v566
        %v569 = vsel %vm567, %v566, %v564
        %570 = vrot.lane.b32.xlu0 %v325, 63
        %v571 = vpop.permute.xlu0 %570
        %572 = vrot.lane.b32.xlu0 %v334, 63
        %v573 = vpop.permute.xlu0 %572
        %v574 = vsel %vm567, %v571, %v573
        %v575 = vsel %vm567, %v573, %v571
        %s576 = scalar_lea.vmem [#allocation2], 5
        %v577 = vld [vmem:[%s576] ss:$8 sm:$0x3]
        %v578 = vstv %s561
        %v579 = vmul.f32 %v578, %v569
        %v580 = vmul.f32 %v578, %v568
        %v581 = vstv %s562
        %v582 = vmul.f32 %v581, %v575
        %v583 = vmul.f32 %v581, %v574
        %v584 = vadd.f32 %v579, %v582
        %v585 = vadd.f32 %v580, %v583
        %v588 = vcombine.low %v584, %v585
        %v590 = vunpack.c.l.s4 1966171168
        %v591 = vunpack.c.0.s8 %v590
        %v592 = vlaneseq
        %v593 = vshrl.u32 %v592, 7
        %v594 = vsub.s32 %v591, %v593
        %v595 = vrot.slane %v588, %v594
        %v597 = vunpack.c.l.s4 1966171168
        %v598 = vunpack.c.0.s8 %v597
        %v599 = vlaneseq
        %v600 = vshrl.u32 %v599, 7
        %v601 = vsub.s32 %v598, %v600
        %v602 = vrot.slane %v595, %v601
        %v604 = vmul.f32 %v577, %v602
        %v605 = vadd.f32 %v560, %v604
        %s606 = sld [smem:[#allocation6 + $0x6]]
        %s607 = sld [smem:[#allocation6 + $0x21]]
        %608 = vrot.lane.b32.xlu0 %v315, 57
        %v609 = vpop.permute.xlu0 %608
        %610 = vrot.lane.b32.xlu0 %v316, 57
        %v611 = vpop.permute.xlu0 %610
        %vm612 = vcmp.lt.s32.totalorder %v342, 57
        %v613 = vsel %vm612, %v609, %v611
        %v614 = vsel %vm612, %v611, %v609
        %615 = vrot.lane.b32.xlu0 %v325, 57
        %v616 = vpop.permute.xlu0 %615
        %617 = vrot.lane.b32.xlu0 %v334, 57
        %v618 = vpop.permute.xlu0 %617
        %v619 = vsel %vm612, %v616, %v618
        %v620 = vsel %vm612, %v618, %v616
        %s621 = scalar_lea.vmem [#allocation2], 6
        %v622 = vld [vmem:[%s621] ss:$8 sm:$0x3]
        %v623 = vstv %s606
        %v624 = vmul.f32 %v623, %v614
        %v625 = vmul.f32 %v623, %v613
        %v626 = vstv %s607
        %v627 = vmul.f32 %v626, %v620
        %v628 = vmul.f32 %v626, %v619
        %v629 = vadd.f32 %v624, %v627
        %v630 = vadd.f32 %v625, %v628
        %v633 = vcombine.low %v629, %v630
        %v635 = vunpack.c.l.s4 1966171168
        %v636 = vunpack.c.0.s8 %v635
        %v637 = vlaneseq
        %v638 = vshrl.u32 %v637, 7
        %v639 = vsub.s32 %v636, %v638
        %v640 = vrot.slane %v633, %v639
        %v642 = vunpack.c.l.s4 1966171168
        %v643 = vunpack.c.0.s8 %v642
        %v644 = vlaneseq
        %v645 = vshrl.u32 %v644, 7
        %v646 = vsub.s32 %v643, %v645
        %v647 = vrot.slane %v640, %v646
        %v649 = vmul.f32 %v622, %v647
        %v650 = vadd.f32 %v605, %v649
        %s651 = sld [smem:[#allocation6 + $0x7]]
        %s652 = sld [smem:[#allocation6 + $0x22]]
        %653 = vrot.lane.b32.xlu0 %v315, 56
        %v654 = vpop.permute.xlu0 %653
        %655 = vrot.lane.b32.xlu0 %v316, 56
        %v656 = vpop.permute.xlu0 %655
        %vm657 = vcmp.lt.s32.totalorder %v342, 56
        %v658 = vsel %vm657, %v654, %v656
        %v659 = vsel %vm657, %v656, %v654
        %660 = vrot.lane.b32.xlu0 %v325, 56
        %v661 = vpop.permute.xlu0 %660
        %662 = vrot.lane.b32.xlu0 %v334, 56
        %v663 = vpop.permute.xlu0 %662
        %v664 = vsel %vm657, %v661, %v663
        %v665 = vsel %vm657, %v663, %v661
        %s666 = scalar_lea.vmem [#allocation2], 7
        %v667 = vld [vmem:[%s666] ss:$8 sm:$0x3]
        %v668 = vstv %s651
        %v669 = vmul.f32 %v668, %v659
        %v670 = vmul.f32 %v668, %v658
        %v671 = vstv %s652
        %v672 = vmul.f32 %v671, %v665
        %v673 = vmul.f32 %v671, %v664
        %v674 = vadd.f32 %v669, %v672
        %v675 = vadd.f32 %v670, %v673
        %v678 = vcombine.low %v674, %v675
        %v680 = vunpack.c.l.s4 1966171168
        %v681 = vunpack.c.0.s8 %v680
        %v682 = vlaneseq
        %v683 = vshrl.u32 %v682, 7
        %v684 = vsub.s32 %v681, %v683
        %v685 = vrot.slane %v678, %v684
        %v687 = vunpack.c.l.s4 1966171168
        %v688 = vunpack.c.0.s8 %v687
        %v689 = vlaneseq
        %v690 = vshrl.u32 %v689, 7
        %v691 = vsub.s32 %v688, %v690
        %v692 = vrot.slane %v685, %v691
        %v694 = vmul.f32 %v667, %v692
        %v695 = vadd.f32 %v650, %v694
        %s696 = sld [smem:[#allocation6 + $0x8]]
        %s697 = sld [smem:[#allocation6 + $0x23]]
        %698 = vrot.lane.b32.xlu0 %v315, 55
        %v699 = vpop.permute.xlu0 %698
        %700 = vrot.lane.b32.xlu0 %v316, 55
        %v701 = vpop.permute.xlu0 %700
        %vm702 = vcmp.lt.s32.totalorder %v342, 55
        %v703 = vsel %vm702, %v699, %v701
        %v704 = vsel %vm702, %v701, %v699
        %705 = vrot.lane.b32.xlu0 %v325, 55
        %v706 = vpop.permute.xlu0 %705
        %707 = vrot.lane.b32.xlu0 %v334, 55
        %v708 = vpop.permute.xlu0 %707
        %v709 = vsel %vm702, %v706, %v708
        %v710 = vsel %vm702, %v708, %v706
        %s711 = scalar_lea.vmem [#allocation2], 16
        %v712 = vld [vmem:[%s711] ss:$8 sm:$0x3]
        %v713 = vstv %s696
        %v714 = vmul.f32 %v713, %v704
        %v715 = vmul.f32 %v713, %v703
        %v716 = vstv %s697
        %v717 = vmul.f32 %v716, %v710
        %v718 = vmul.f32 %v716, %v709
        %v719 = vadd.f32 %v714, %v717
        %v720 = vadd.f32 %v715, %v718
        %v723 = vcombine.low %v719, %v720
        %v725 = vunpack.c.l.s4 1966171168
        %v726 = vunpack.c.0.s8 %v725
        %v727 = vlaneseq
        %v728 = vshrl.u32 %v727, 7
        %v729 = vsub.s32 %v726, %v728
        %v730 = vrot.slane %v723, %v729
        %v732 = vunpack.c.l.s4 1966171168
        %v733 = vunpack.c.0.s8 %v732
        %v734 = vlaneseq
        %v735 = vshrl.u32 %v734, 7
        %v736 = vsub.s32 %v733, %v735
        %v737 = vrot.slane %v730, %v736
        %v739 = vmul.f32 %v712, %v737
        %v740 = vadd.f32 %v695, %v739
        %s741 = sld [smem:[#allocation6 + $0x9]]
        %s742 = sld [smem:[#allocation6 + $0x24]]
        %743 = vrot.lane.b32.xlu0 %v315, 9
        %v744 = vpop.permute.xlu0 %743
        %745 = vrot.lane.b32.xlu0 %v316, 9
        %v746 = vpop.permute.xlu0 %745
        %vm747 = vcmp.lt.s32.totalorder %v342, 9
        %v748 = vsel %vm747, %v744, %v746
        %v749 = vsel %vm747, %v746, %v744
        %750 = vrot.lane.b32.xlu0 %v325, 9
        %v751 = vpop.permute.xlu0 %750
        %752 = vrot.lane.b32.xlu0 %v334, 9
        %v753 = vpop.permute.xlu0 %752
        %v754 = vsel %vm747, %v751, %v753
        %v755 = vsel %vm747, %v753, %v751
        %s756 = scalar_lea.vmem [#allocation2], 17
        %v757 = vld [vmem:[%s756] ss:$8 sm:$0x3]
        %v758 = vstv %s741
        %v759 = vmul.f32 %v758, %v749
        %v760 = vmul.f32 %v758, %v748
        %v761 = vstv %s742
        %v762 = vmul.f32 %v761, %v755
        %v763 = vmul.f32 %v761, %v754
        %v764 = vadd.f32 %v759, %v762
        %v765 = vadd.f32 %v760, %v763
        %v768 = vcombine.low %v764, %v765
        %v770 = vunpack.c.l.s4 1966171168
        %v771 = vunpack.c.0.s8 %v770
        %v772 = vlaneseq
        %v773 = vshrl.u32 %v772, 7
        %v774 = vsub.s32 %v771, %v773
        %v775 = vrot.slane %v768, %v774
        %v777 = vunpack.c.l.s4 1966171168
        %v778 = vunpack.c.0.s8 %v777
        %v779 = vlaneseq
        %v780 = vshrl.u32 %v779, 7
        %v781 = vsub.s32 %v778, %v780
        %v782 = vrot.slane %v775, %v781
        %v784 = vmul.f32 %v757, %v782
        %v785 = vadd.f32 %v740, %v784
        %s786 = sld [smem:[#allocation6 + $0xa]]
        %s787 = sld [smem:[#allocation6 + $0x25]]
        %788 = vrot.lane.b32.xlu0 %v315, 8
        %v789 = vpop.permute.xlu0 %788
        %790 = vrot.lane.b32.xlu0 %v316, 8
        %v791 = vpop.permute.xlu0 %790
        %vm792 = vcmp.lt.s32.totalorder %v342, 8
        %v793 = vsel %vm792, %v789, %v791
        %v794 = vsel %vm792, %v791, %v789
        %795 = vrot.lane.b32.xlu0 %v325, 8
        %v796 = vpop.permute.xlu0 %795
        %797 = vrot.lane.b32.xlu0 %v334, 8
        %v798 = vpop.permute.xlu0 %797
        %v799 = vsel %vm792, %v796, %v798
        %v800 = vsel %vm792, %v798, %v796
        %s801 = scalar_lea.vmem [#allocation2], 18
        %v802 = vld [vmem:[%s801] ss:$8 sm:$0x3]
        %v803 = vstv %s786
        %v804 = vmul.f32 %v803, %v794
        %v805 = vmul.f32 %v803, %v793
        %v806 = vstv %s787
        %v807 = vmul.f32 %v806, %v800
        %v808 = vmul.f32 %v806, %v799
        %v809 = vadd.f32 %v804, %v807
        %v810 = vadd.f32 %v805, %v808
        %v813 = vcombine.low %v809, %v810
        %v815 = vunpack.c.l.s4 1966171168
        %v816 = vunpack.c.0.s8 %v815
        %v817 = vlaneseq
        %v818 = vshrl.u32 %v817, 7
        %v819 = vsub.s32 %v816, %v818
        %v820 = vrot.slane %v813, %v819
        %v822 = vunpack.c.l.s4 1966171168
        %v823 = vunpack.c.0.s8 %v822
        %v824 = vlaneseq
        %v825 = vshrl.u32 %v824, 7
        %v826 = vsub.s32 %v823, %v825
        %v827 = vrot.slane %v820, %v826
        %v829 = vmul.f32 %v802, %v827
        %v830 = vadd.f32 %v785, %v829
        %s831 = sld [smem:[#allocation6 + $0xb]]
        %s832 = sld [smem:[#allocation6 + $0x26]]
        %833 = vrot.lane.b32.xlu0 %v315, 7
        %v834 = vpop.permute.xlu0 %833
        %835 = vrot.lane.b32.xlu0 %v316, 7
        %v836 = vpop.permute.xlu0 %835
        %vm837 = vcmp.lt.s32.totalorder %v342, 7
        %v838 = vsel %vm837, %v834, %v836
        %v839 = vsel %vm837, %v836, %v834
        %840 = vrot.lane.b32.xlu0 %v325, 7
        %v841 = vpop.permute.xlu0 %840
        %842 = vrot.lane.b32.xlu0 %v334, 7
        %v843 = vpop.permute.xlu0 %842
        %v844 = vsel %vm837, %v841, %v843
        %v845 = vsel %vm837, %v843, %v841
        %s846 = scalar_lea.vmem [#allocation2], 19
        %v847 = vld [vmem:[%s846] ss:$8 sm:$0x3]
        %v848 = vstv %s831
        %v849 = vmul.f32 %v848, %v839
        %v850 = vmul.f32 %v848, %v838
        %v851 = vstv %s832
        %v852 = vmul.f32 %v851, %v845
        %v853 = vmul.f32 %v851, %v844
        %v854 = vadd.f32 %v849, %v852
        %v855 = vadd.f32 %v850, %v853
        %v858 = vcombine.low %v854, %v855
        %v860 = vunpack.c.l.s4 1966171168
        %v861 = vunpack.c.0.s8 %v860
        %v862 = vlaneseq
        %v863 = vshrl.u32 %v862, 7
        %v864 = vsub.s32 %v861, %v863
        %v865 = vrot.slane %v858, %v864
        %v867 = vunpack.c.l.s4 1966171168
        %v868 = vunpack.c.0.s8 %v867
        %v869 = vlaneseq
        %v870 = vshrl.u32 %v869, 7
        %v871 = vsub.s32 %v868, %v870
        %v872 = vrot.slane %v865, %v871
        %v874 = vmul.f32 %v847, %v872
        %v875 = vadd.f32 %v830, %v874
        %s876 = sld [smem:[#allocation6 + $0xc]]
        %s877 = sld [smem:[#allocation6 + $0x27]]
        %878 = vrot.lane.b32.xlu0 %v315, 1
        %v879 = vpop.permute.xlu0 %878
        %880 = vrot.lane.b32.xlu0 %v316, 1
        %v881 = vpop.permute.xlu0 %880
        %vm882 = vcmp.lt.s32.totalorder %v342, 1
        %v883 = vsel %vm882, %v879, %v881
        %v884 = vsel %vm882, %v881, %v879
        %885 = vrot.lane.b32.xlu0 %v325, 1
        %v886 = vpop.permute.xlu0 %885
        %887 = vrot.lane.b32.xlu0 %v334, 1
        %v888 = vpop.permute.xlu0 %887
        %v889 = vsel %vm882, %v886, %v888
        %v890 = vsel %vm882, %v888, %v886
        %s891 = scalar_lea.vmem [#allocation2], 20
        %v892 = vld [vmem:[%s891] ss:$8 sm:$0x3]
        %v893 = vstv %s876
        %v894 = vmul.f32 %v893, %v884
        %v895 = vmul.f32 %v893, %v883
        %v896 = vstv %s877
        %v897 = vmul.f32 %v896, %v890
        %v898 = vmul.f32 %v896, %v889
        %v899 = vadd.f32 %v894, %v897
        %v900 = vadd.f32 %v895, %v898
        %v903 = vcombine.low %v899, %v900
        %v905 = vunpack.c.l.s4 1966171168
        %v906 = vunpack.c.0.s8 %v905
        %v907 = vlaneseq
        %v908 = vshrl.u32 %v907, 7
        %v909 = vsub.s32 %v906, %v908
        %v910 = vrot.slane %v903, %v909
        %v912 = vunpack.c.l.s4 1966171168
        %v913 = vunpack.c.0.s8 %v912
        %v914 = vlaneseq
        %v915 = vshrl.u32 %v914, 7
        %v916 = vsub.s32 %v913, %v915
        %v917 = vrot.slane %v910, %v916
        %v919 = vmul.f32 %v892, %v917
        %v920 = vadd.f32 %v875, %v919
        %s921 = sld [smem:[#allocation6 + $0xd]]
        %s922 = sld [smem:[#allocation6 + $0x28]]
        %v923 = vstv %s921
        %v924 = vmul.f32 %v923, %v315
        %v925 = vmul.f32 %v923, %v316
        %v926 = vstv %s922
        %v927 = vmul.f32 %v926, %v325
        %v928 = vmul.f32 %v926, %v334
        %v929 = vadd.f32 %v924, %v927
        %v930 = vadd.f32 %v925, %v928
        %v933 = vcombine.low %v929, %v930
        %v935 = vunpack.c.l.s4 1966171168
        %v936 = vunpack.c.0.s8 %v935
        %v937 = vlaneseq
        %v938 = vshrl.u32 %v937, 7
        %v939 = vsub.s32 %v936, %v938
        %v940 = vrot.slane %v933, %v939
        %v942 = vunpack.c.l.s4 1966171168
        %v943 = vunpack.c.0.s8 %v942
        %v944 = vlaneseq
        %v945 = vshrl.u32 %v944, 7
        %v946 = vsub.s32 %v943, %v945
        %v947 = vrot.slane %v940, %v946
        %v949 = vadd.f32 %v920, %v947
        %s950 = sld [smem:[#allocation6 + $0xe]]
        %s951 = sld [smem:[#allocation6 + $0x29]]
        %952 = vrot.lane.b32.xlu0 %v315, 127
        %v953 = vpop.permute.xlu0 %952
        %954 = vrot.lane.b32.xlu0 %v316, 127
        %v955 = vpop.permute.xlu0 %954
        %vm956 = vcmp.lt.s32.totalorder %v342, 127
        %v957 = vsel %vm956, %v953, %v955
        %v958 = vsel %vm956, %v955, %v953
        %959 = vrot.lane.b32.xlu0 %v325, 127
        %v960 = vpop.permute.xlu0 %959
        %961 = vrot.lane.b32.xlu0 %v334, 127
        %v962 = vpop.permute.xlu0 %961
        %v963 = vsel %vm956, %v960, %v962
        %v964 = vsel %vm956, %v962, %v960
        %s965 = scalar_lea.vmem [#allocation2], 22
        %v966 = vld [vmem:[%s965] ss:$8 sm:$0x3]
        %v967 = vstv %s950
        %v968 = vmul.f32 %v967, %v957
        %v969 = vmul.f32 %v967, %v958
        %v970 = vstv %s951
        %v971 = vmul.f32 %v970, %v963
        %v972 = vmul.f32 %v970, %v964
        %v973 = vadd.f32 %v968, %v971
        %v974 = vadd.f32 %v969, %v972
        %v977 = vcombine.low %v973, %v974
        %v979 = vunpack.c.l.s4 1966171168
        %v980 = vunpack.c.0.s8 %v979
        %v981 = vlaneseq
        %v982 = vshrl.u32 %v981, 7
        %v983 = vsub.s32 %v980, %v982
        %v984 = vrot.slane %v977, %v983
        %v986 = vunpack.c.l.s4 1966171168
        %v987 = vunpack.c.0.s8 %v986
        %v988 = vlaneseq
        %v989 = vshrl.u32 %v988, 7
        %v990 = vsub.s32 %v987, %v989
        %v991 = vrot.slane %v984, %v990
        %v993 = vmul.f32 %v966, %v991
        %v994 = vadd.f32 %v949, %v993
        %s995 = sld [smem:[#allocation6 + $0xf]]
        %s996 = sld [smem:[#allocation6 + $0x2a]]
        %997 = vrot.lane.b32.xlu0 %v315, 121
        %v998 = vpop.permute.xlu0 %997
        %999 = vrot.lane.b32.xlu0 %v316, 121
        %v1000 = vpop.permute.xlu0 %999
        %vm1001 = vcmp.lt.s32.totalorder %v342, 121
        %v1002 = vsel %vm1001, %v998, %v1000
        %v1003 = vsel %vm1001, %v1000, %v998
        %1004 = vrot.lane.b32.xlu0 %v325, 121
        %v1005 = vpop.permute.xlu0 %1004
        %1006 = vrot.lane.b32.xlu0 %v334, 121
        %v1007 = vpop.permute.xlu0 %1006
        %v1008 = vsel %vm1001, %v1005, %v1007
        %v1009 = vsel %vm1001, %v1007, %v1005
        %s1010 = scalar_lea.vmem [#allocation2], 23
        %v1011 = vld [vmem:[%s1010] ss:$8 sm:$0x3]
        %v1012 = vstv %s995
        %v1013 = vmul.f32 %v1012, %v1002
        %v1014 = vmul.f32 %v1012, %v1003
        %v1015 = vstv %s996
        %v1016 = vmul.f32 %v1015, %v1008
        %v1017 = vmul.f32 %v1015, %v1009
        %v1018 = vadd.f32 %v1013, %v1016
        %v1019 = vadd.f32 %v1014, %v1017
        %v1022 = vcombine.low %v1018, %v1019
        %v1024 = vunpack.c.l.s4 1966171168
        %v1025 = vunpack.c.0.s8 %v1024
        %v1026 = vlaneseq
        %v1027 = vshrl.u32 %v1026, 7
        %v1028 = vsub.s32 %v1025, %v1027
        %v1029 = vrot.slane %v1022, %v1028
        %v1031 = vunpack.c.l.s4 1966171168
        %v1032 = vunpack.c.0.s8 %v1031
        %v1033 = vlaneseq
        %v1034 = vshrl.u32 %v1033, 7
        %v1035 = vsub.s32 %v1032, %v1034
        %v1036 = vrot.slane %v1029, %v1035
        %v1038 = vmul.f32 %v1011, %v1036
        %v1039 = vadd.f32 %v994, %v1038
        %s1040 = sld [smem:[#allocation6 + $0x10]]
        %s1041 = sld [smem:[#allocation6 + $0x2b]]
        %1042 = vrot.lane.b32.xlu0 %v315, 120
        %v1043 = vpop.permute.xlu0 %1042
        %1044 = vrot.lane.b32.xlu0 %v316, 120
        %v1045 = vpop.permute.xlu0 %1044
        %vm1046 = vcmp.lt.s32.totalorder %v342, 120
        %v1047 = vsel %vm1046, %v1043, %v1045
        %v1048 = vsel %vm1046, %v1045, %v1043
        %1049 = vrot.lane.b32.xlu0 %v325, 120
        %v1050 = vpop.permute.xlu0 %1049
        %1051 = vrot.lane.b32.xlu0 %v334, 120
        %v1052 = vpop.permute.xlu0 %1051
        %v1053 = vsel %vm1046, %v1050, %v1052
        %v1054 = vsel %vm1046, %v1052, %v1050
        %s1055 = scalar_lea.vmem [#allocation2], 32
        %v1056 = vld [vmem:[%s1055] ss:$8 sm:$0x3]
        %v1057 = vstv %s1040
        %v1058 = vmul.f32 %v1057, %v1047
        %v1059 = vmul.f32 %v1057, %v1048
        %v1060 = vstv %s1041
        %v1061 = vmul.f32 %v1060, %v1053
        %v1062 = vmul.f32 %v1060, %v1054
        %v1063 = vadd.f32 %v1058, %v1061
        %v1064 = vadd.f32 %v1059, %v1062
        %v1067 = vcombine.low %v1063, %v1064
        %v1069 = vunpack.c.l.s4 1966171168
        %v1070 = vunpack.c.0.s8 %v1069
        %v1071 = vlaneseq
        %v1072 = vshrl.u32 %v1071, 7
        %v1073 = vsub.s32 %v1070, %v1072
        %v1074 = vrot.slane %v1067, %v1073
        %v1076 = vunpack.c.l.s4 1966171168
        %v1077 = vunpack.c.0.s8 %v1076
        %v1078 = vlaneseq
        %v1079 = vshrl.u32 %v1078, 7
        %v1080 = vsub.s32 %v1077, %v1079
        %v1081 = vrot.slane %v1074, %v1080
        %v1083 = vmul.f32 %v1056, %v1081
        %v1084 = vadd.f32 %v1039, %v1083
        %s1085 = sld [smem:[#allocation6 + $0x11]]
        %s1086 = sld [smem:[#allocation6 + $0x2c]]
        %1087 = vrot.lane.b32.xlu0 %v315, 119
        %v1088 = vpop.permute.xlu0 %1087
        %1089 = vrot.lane.b32.xlu0 %v316, 119
        %v1090 = vpop.permute.xlu0 %1089
        %vm1091 = vcmp.lt.s32.totalorder %v342, 119
        %v1092 = vsel %vm1091, %v1088, %v1090
        %v1093 = vsel %vm1091, %v1090, %v1088
        %1094 = vrot.lane.b32.xlu0 %v325, 119
        %v1095 = vpop.permute.xlu0 %1094
        %1096 = vrot.lane.b32.xlu0 %v334, 119
        %v1097 = vpop.permute.xlu0 %1096
        %v1098 = vsel %vm1091, %v1095, %v1097
        %v1099 = vsel %vm1091, %v1097, %v1095
        %s1100 = scalar_lea.vmem [#allocation2], 33
        %v1101 = vld [vmem:[%s1100] ss:$8 sm:$0x3]
        %v1102 = vstv %s1085
        %v1103 = vmul.f32 %v1102, %v1092
        %v1104 = vmul.f32 %v1102, %v1093
        %v1105 = vstv %s1086
        %v1106 = vmul.f32 %v1105, %v1098
        %v1107 = vmul.f32 %v1105, %v1099
        %v1108 = vadd.f32 %v1103, %v1106
        %v1109 = vadd.f32 %v1104, %v1107
        %v1112 = vcombine.low %v1108, %v1109
        %v1114 = vunpack.c.l.s4 1966171168
        %v1115 = vunpack.c.0.s8 %v1114
        %v1116 = vlaneseq
        %v1117 = vshrl.u32 %v1116, 7
        %v1118 = vsub.s32 %v1115, %v1117
        %v1119 = vrot.slane %v1112, %v1118
        %v1121 = vunpack.c.l.s4 1966171168
        %v1122 = vunpack.c.0.s8 %v1121
        %v1123 = vlaneseq
        %v1124 = vshrl.u32 %v1123, 7
        %v1125 = vsub.s32 %v1122, %v1124
        %v1126 = vrot.slane %v1119, %v1125
        %v1128 = vmul.f32 %v1101, %v1126
        %v1129 = vadd.f32 %v1084, %v1128
        %s1130 = sld [smem:[#allocation6 + $0x12]]
        %s1131 = sld [smem:[#allocation6 + $0x2d]]
        %s1132 = scalar_lea.vmem [#allocation2], 34
        %v1133 = vld [vmem:[%s1132] ss:$8 sm:$0x3]
        %v1134 = vstv %s1130
        %v1135 = vmul.f32 %v1134, %v344
        %v1136 = vmul.f32 %v1134, %v345
        %v1137 = vstv %s1131
        %v1138 = vmul.f32 %v1137, %v350
        %v1139 = vmul.f32 %v1137, %v351
        %v1140 = vadd.f32 %v1135, %v1138
        %v1141 = vadd.f32 %v1136, %v1139
        %v1144 = vcombine.low %v1140, %v1141
        %v1146 = vunpack.c.l.s4 1966171168
        %v1147 = vunpack.c.0.s8 %v1146
        %v1148 = vlaneseq
        %v1149 = vshrl.u32 %v1148, 7
        %v1150 = vsub.s32 %v1147, %v1149
        %v1151 = vrot.slane %v1144, %v1150
        %v1153 = vunpack.c.l.s4 1966171168
        %v1154 = vunpack.c.0.s8 %v1153
        %v1155 = vlaneseq
        %v1156 = vshrl.u32 %v1155, 7
        %v1157 = vsub.s32 %v1154, %v1156
        %v1158 = vrot.slane %v1151, %v1157
        %v1160 = vmul.f32 %v1133, %v1158
        %v1161 = vadd.f32 %v1129, %v1160
        %s1162 = sld [smem:[#allocation6 + $0x13]]
        %s1163 = sld [smem:[#allocation6 + $0x2e]]
        %s1164 = scalar_lea.vmem [#allocation2], 35
        %v1165 = vld [vmem:[%s1164] ss:$8 sm:$0x3]
        %v1166 = vstv %s1162
        %v1167 = vmul.f32 %v1166, %v388
        %v1168 = vmul.f32 %v1166, %v389
        %v1169 = vstv %s1163
        %v1170 = vmul.f32 %v1169, %v394
        %v1171 = vmul.f32 %v1169, %v395
        %v1172 = vadd.f32 %v1167, %v1170
        %v1173 = vadd.f32 %v1168, %v1171
        %v1176 = vcombine.low %v1172, %v1173
        %v1178 = vunpack.c.l.s4 1966171168
        %v1179 = vunpack.c.0.s8 %v1178
        %v1180 = vlaneseq
        %v1181 = vshrl.u32 %v1180, 7
        %v1182 = vsub.s32 %v1179, %v1181
        %v1183 = vrot.slane %v1176, %v1182
        %v1185 = vunpack.c.l.s4 1966171168
        %v1186 = vunpack.c.0.s8 %v1185
        %v1187 = vlaneseq
        %v1188 = vshrl.u32 %v1187, 7
        %v1189 = vsub.s32 %v1186, %v1188
        %v1190 = vrot.slane %v1183, %v1189
        %v1192 = vmul.f32 %v1165, %v1190
        %v1193 = vadd.f32 %v1161, %v1192
        %s1194 = sld [smem:[#allocation6 + $0x14]]
        %s1195 = sld [smem:[#allocation6 + $0x2f]]
        %s1196 = scalar_lea.vmem [#allocation2], 36
        %v1197 = vld [vmem:[%s1196] ss:$8 sm:$0x3]
        %v1198 = vstv %s1194
        %v1199 = vmul.f32 %v1198, %v433
        %v1200 = vmul.f32 %v1198, %v434
        %v1201 = vstv %s1195
        %v1202 = vmul.f32 %v1201, %v439
        %v1203 = vmul.f32 %v1201, %v440
        %v1204 = vadd.f32 %v1199, %v1202
        %v1205 = vadd.f32 %v1200, %v1203
        %v1208 = vcombine.low %v1204, %v1205
        %v1210 = vunpack.c.l.s4 1966171168
        %v1211 = vunpack.c.0.s8 %v1210
        %v1212 = vlaneseq
        %v1213 = vshrl.u32 %v1212, 7
        %v1214 = vsub.s32 %v1211, %v1213
        %v1215 = vrot.slane %v1208, %v1214
        %v1217 = vunpack.c.l.s4 1966171168
        %v1218 = vunpack.c.0.s8 %v1217
        %v1219 = vlaneseq
        %v1220 = vshrl.u32 %v1219, 7
        %v1221 = vsub.s32 %v1218, %v1220
        %v1222 = vrot.slane %v1215, %v1221
        %v1224 = vmul.f32 %v1197, %v1222
        %v1225 = vadd.f32 %v1193, %v1224
        %s1226 = sld [smem:[#allocation6 + $0x15]]
        %s1227 = sld [smem:[#allocation6 + $0x30]]
        %s1228 = scalar_lea.vmem [#allocation2], 37
        %v1229 = vld [vmem:[%s1228] ss:$8 sm:$0x3]
        %v1230 = vstv %s1226
        %v1231 = vmul.f32 %v1230, %v478
        %v1232 = vmul.f32 %v1230, %v479
        %v1233 = vstv %s1227
        %v1234 = vmul.f32 %v1233, %v484
        %v1235 = vmul.f32 %v1233, %v485
        %v1236 = vadd.f32 %v1231, %v1234
        %v1237 = vadd.f32 %v1232, %v1235
        %v1240 = vcombine.low %v1236, %v1237
        %v1242 = vunpack.c.l.s4 1966171168
        %v1243 = vunpack.c.0.s8 %v1242
        %v1244 = vlaneseq
        %v1245 = vshrl.u32 %v1244, 7
        %v1246 = vsub.s32 %v1243, %v1245
        %v1247 = vrot.slane %v1240, %v1246
        %v1249 = vunpack.c.l.s4 1966171168
        %v1250 = vunpack.c.0.s8 %v1249
        %v1251 = vlaneseq
        %v1252 = vshrl.u32 %v1251, 7
        %v1253 = vsub.s32 %v1250, %v1252
        %v1254 = vrot.slane %v1247, %v1253
        %v1256 = vmul.f32 %v1229, %v1254
        %v1257 = vadd.f32 %v1225, %v1256
        %s1258 = sld [smem:[#allocation6 + $0x16]]
        %s1259 = sld [smem:[#allocation6 + $0x31]]
        %s1260 = scalar_lea.vmem [#allocation2], 38
        %v1261 = vld [vmem:[%s1260] ss:$8 sm:$0x3]
        %v1262 = vstv %s1258
        %v1263 = vmul.f32 %v1262, %v523
        %v1264 = vmul.f32 %v1262, %v524
        %v1265 = vstv %s1259
        %v1266 = vmul.f32 %v1265, %v529
        %v1267 = vmul.f32 %v1265, %v530
        %v1268 = vadd.f32 %v1263, %v1266
        %v1269 = vadd.f32 %v1264, %v1267
        %v1272 = vcombine.low %v1268, %v1269
        %v1274 = vunpack.c.l.s4 1966171168
        %v1275 = vunpack.c.0.s8 %v1274
        %v1276 = vlaneseq
        %v1277 = vshrl.u32 %v1276, 7
        %v1278 = vsub.s32 %v1275, %v1277
        %v1279 = vrot.slane %v1272, %v1278
        %v1281 = vunpack.c.l.s4 1966171168
        %v1282 = vunpack.c.0.s8 %v1281
        %v1283 = vlaneseq
        %v1284 = vshrl.u32 %v1283, 7
        %v1285 = vsub.s32 %v1282, %v1284
        %v1286 = vrot.slane %v1279, %v1285
        %v1288 = vmul.f32 %v1261, %v1286
        %v1289 = vadd.f32 %v1257, %v1288
        %s1290 = sld [smem:[#allocation6 + $0x17]]
        %s1291 = sld [smem:[#allocation6 + $0x32]]
        %s1292 = scalar_lea.vmem [#allocation2], 39
        %v1293 = vld [vmem:[%s1292] ss:$8 sm:$0x3]
        %v1294 = vstv %s1290
        %v1295 = vmul.f32 %v1294, %v568
        %v1296 = vmul.f32 %v1294, %v569
        %v1297 = vstv %s1291
        %v1298 = vmul.f32 %v1297, %v574
        %v1299 = vmul.f32 %v1297, %v575
        %v1300 = vadd.f32 %v1295, %v1298
        %v1301 = vadd.f32 %v1296, %v1299
        %v1304 = vcombine.low %v1300, %v1301
        %v1306 = vunpack.c.l.s4 1966171168
        %v1307 = vunpack.c.0.s8 %v1306
        %v1308 = vlaneseq
        %v1309 = vshrl.u32 %v1308, 7
        %v1310 = vsub.s32 %v1307, %v1309
        %v1311 = vrot.slane %v1304, %v1310
        %v1313 = vunpack.c.l.s4 1966171168
        %v1314 = vunpack.c.0.s8 %v1313
        %v1315 = vlaneseq
        %v1316 = vshrl.u32 %v1315, 7
        %v1317 = vsub.s32 %v1314, %v1316
        %v1318 = vrot.slane %v1311, %v1317
        %v1320 = vmul.f32 %v1293, %v1318
        %v1321 = vadd.f32 %v1289, %v1320
        %s1322 = sld [smem:[#allocation6 + $0x18]]
        %s1323 = sld [smem:[#allocation6 + $0x33]]
        %s1324 = scalar_lea.vmem [#allocation2], 48
        %v1325 = vld [vmem:[%s1324] ss:$8 sm:$0x3]
        %v1326 = vstv %s1322
        %v1327 = vmul.f32 %v1326, %v613
        %v1328 = vmul.f32 %v1326, %v614
        %v1329 = vstv %s1323
        %v1330 = vmul.f32 %v1329, %v619
        %v1331 = vmul.f32 %v1329, %v620
        %v1332 = vadd.f32 %v1327, %v1330
        %v1333 = vadd.f32 %v1328, %v1331
        %v1336 = vcombine.low %v1332, %v1333
        %v1338 = vunpack.c.l.s4 1966171168
        %v1339 = vunpack.c.0.s8 %v1338
        %v1340 = vlaneseq
        %v1341 = vshrl.u32 %v1340, 7
        %v1342 = vsub.s32 %v1339, %v1341
        %v1343 = vrot.slane %v1336, %v1342
        %v1345 = vunpack.c.l.s4 1966171168
        %v1346 = vunpack.c.0.s8 %v1345
        %v1347 = vlaneseq
        %v1348 = vshrl.u32 %v1347, 7
        %v1349 = vsub.s32 %v1346, %v1348
        %v1350 = vrot.slane %v1343, %v1349
        %v1352 = vmul.f32 %v1325, %v1350
        %v1353 = vadd.f32 %v1321, %v1352
        %s1354 = sld [smem:[#allocation6 + $0x19]]
        %s1355 = sld [smem:[#allocation6 + $0x34]]
        %s1356 = scalar_lea.vmem [#allocation2], 49
        %v1357 = vld [vmem:[%s1356] ss:$8 sm:$0x3]
        %v1358 = vstv %s1354
        %v1359 = vmul.f32 %v1358, %v658
        %v1360 = vmul.f32 %v1358, %v659
        %v1361 = vstv %s1355
        %v1362 = vmul.f32 %v1361, %v664
        %v1363 = vmul.f32 %v1361, %v665
        %v1364 = vadd.f32 %v1359, %v1362
        %v1365 = vadd.f32 %v1360, %v1363
        %v1368 = vcombine.low %v1364, %v1365
        %v1370 = vunpack.c.l.s4 1966171168
        %v1371 = vunpack.c.0.s8 %v1370
        %v1372 = vlaneseq
        %v1373 = vshrl.u32 %v1372, 7
        %v1374 = vsub.s32 %v1371, %v1373
        %v1375 = vrot.slane %v1368, %v1374
        %v1377 = vunpack.c.l.s4 1966171168
        %v1378 = vunpack.c.0.s8 %v1377
        %v1379 = vlaneseq
        %v1380 = vshrl.u32 %v1379, 7
        %v1381 = vsub.s32 %v1378, %v1380
        %v1382 = vrot.slane %v1375, %v1381
        %v1384 = vmul.f32 %v1357, %v1382
        %v1385 = vadd.f32 %v1353, %v1384
        %s1386 = sld [smem:[#allocation6 + $0x1a]]
        %s1387 = sld [smem:[#allocation6 + $0x35]]
        %s1388 = scalar_lea.vmem [#allocation2], 50
        %v1389 = vld [vmem:[%s1388] ss:$8 sm:$0x3]
        %v1390 = vstv %s1386
        %v1391 = vmul.f32 %v1390, %v703
        %v1392 = vmul.f32 %v1390, %v704
        %v1393 = vstv %s1387
        %v1394 = vmul.f32 %v1393, %v709
        %v1395 = vmul.f32 %v1393, %v710
        %v1396 = vadd.f32 %v1391, %v1394
        %v1397 = vadd.f32 %v1392, %v1395
        %v1400 = vcombine.low %v1396, %v1397
        %v1402 = vunpack.c.l.s4 1966171168
        %v1403 = vunpack.c.0.s8 %v1402
        %v1404 = vlaneseq
        %v1405 = vshrl.u32 %v1404, 7
        %v1406 = vsub.s32 %v1403, %v1405
        %v1407 = vrot.slane %v1400, %v1406
        %v1409 = vunpack.c.l.s4 1966171168
        %v1410 = vunpack.c.0.s8 %v1409
        %v1411 = vlaneseq
        %v1412 = vshrl.u32 %v1411, 7
        %v1413 = vsub.s32 %v1410, %v1412
        %v1414 = vrot.slane %v1407, %v1413
        %v1416 = vmul.f32 %v1389, %v1414
        %v1417 = vadd.f32 %v1385, %v1416
        %s1418 = sld [smem:[#allocation6 + $0x36]]
        %v1419 = vstv %s1418
        %v1420 = vadd.f32 %v1417, %v1419
        %v1421 = vmax.f32 %v1420, 0.0
        %v1422 = vxor.u32 %v1421, 2147483648
        %v1423 = vmul.f32 %v1422, 1.442695
        %v1424 = vpow.pop %v1423
        %v1425 = vadd.f32 %v1424, 1.0
        %v1426 = vrcp.pop %v1425
        %v1427 = vmul.f32 1.0, %v1426
        %v1429 = vlaneseq
        %v1430 = vshrl.u32 %v1429, 7
        %v1431 = vsub.s32 0, %v1430
        %v1432 = vrot.slane %v1427, %v1431
        %v1433 = vlaneseq
        %v1434 = vshrl.u32 %v1433, 7
        %v1435 = vsub.s32 1, %v1434
        %v1436 = vrot.slane %v1427, %v1435
        %v1439 = vmul.f32 %v280, %v1432
        %v1440 = vmul.f32 %v281, %v1436
        %v1441 = vmul.f32 %v282, %v1432
        %v1442 = vmul.f32 %v283, %v1436
        %v1443 = vmul.f32 %v284, %v1432
        %v1444 = vmul.f32 %v285, %v1436
        %v1445 = vmul.f32 %v286, %v1432
        %v1446 = vmul.f32 %v287, %v1436
        %v1447 = vsub.f32 1.0, %v1427
        %v1449 = vlaneseq
        %v1450 = vshrl.u32 %v1449, 7
        %v1451 = vsub.s32 0, %v1450
        %v1452 = vrot.slane %v1447, %v1451
        %v1453 = vlaneseq
        %v1454 = vshrl.u32 %v1453, 7
        %v1455 = vsub.s32 1, %v1454
        %v1456 = vrot.slane %v1447, %v1455
        %v1459 = vmul.f32 %v288, %v1452
        %v1460 = vmul.f32 %v289, %v1456
        %v1461 = vmul.f32 %v290, %v1452
        %v1462 = vmul.f32 %v291, %v1456
        %v1463 = vmul.f32 %v292, %v1452
        %v1464 = vmul.f32 %v293, %v1456
        %v1465 = vmul.f32 %v294, %v1452
        %v1466 = vmul.f32 %v295, %v1456
        %v1467 = vadd.f32 %v1439, %v1459
        %v1468 = vadd.f32 %v1440, %v1460
        %v1469 = vadd.f32 %v1441, %v1461
        %v1470 = vadd.f32 %v1442, %v1462
        %v1471 = vadd.f32 %v1443, %v1463
        %v1472 = vadd.f32 %v1444, %v1464
        %v1473 = vadd.f32 %v1445, %v1465
        %v1474 = vadd.f32 %v1446, %v1466
        %1475 = vst [vmem:[%s279] sm:$0xff] %v1467
        %1476 = vst [vmem:[%s279 + $0x8] sm:$0xff] %v1468
        %1477 = vst [vmem:[%s279 + $0x10] sm:$0xff] %v1469
        %1478 = vst [vmem:[%s279 + $0x18] sm:$0xff] %v1470
        %1479 = vst [vmem:[%s279 + $0x20] sm:$0xff] %v1471
        %1480 = vst [vmem:[%s279 + $0x28] sm:$0xff] %v1472
        %1481 = vst [vmem:[%s279 + $0x30] sm:$0xff] %v1473
        %1482 = vst [vmem:[%s279 + $0x38] sm:$0xff] %v1474
        %s1483 = sand.u32 %s125, 1
        %s1484 = scalar_lea.sflag [#allocation4], %s1483
        %s1485 = sand.u32 %s125, 1
        %s1486 = smul.addr %s1485, 64
        %s1487 = scalar_lea.vmem [#allocation10], %s1486
        // Predicated region
        $region53: #{tpu_custom_call.1} parent=35 // pred_check
          %p1488 = pneg %p135
        $region54: #{tpu_custom_call.1} parent=35 // pred_check_branch
          %1490 = sbr.rel (%p1488) target = $region56
        $region55: #{tpu_custom_call.1} parent=35 // pred_region
          %s1492 = ssub.s32 1024, 1024
          %1493 = vsyncadd %s1484, %s1492
          %s1494 = smul.addr %s23, 8
          %s1495 = smul.addr %s1494, 128
          %s1496 = scalar_lea.hbm %s4, %s1495
          %s1497 = sshll.u32 %s1487, 4
          %s1498 = int_to_ptr.vmem [resolvable:$true] %s1497
          %1503 = dma.vmem_to_hbm [thread:$0]  %s1498, 1024, %s1496, %s1484, 256, 256, 16
        $region56: #{tpu_custom_call.1} parent=35 // pred_fallthru
          _
      $region36: #{tpu_custom_call.1} parent=5 // pred_fallthru
        _
      %p1504 = scmp.le.s32.totalorder 2, %s18
      // Predicated region
      $region57: #{tpu_custom_call.1} parent=5 // pred_check
        %p1505 = pneg %p1504
      $region58: #{tpu_custom_call.1} parent=5 // pred_check_branch
        %1507 = sbr.rel (%p1505) target = $region60
      $region59: #{tpu_custom_call.1} parent=5 // pred_region
        %s1508 = ssub.s32 %s18, 2
        // Predicated region
        $region61: #{tpu_custom_call.1} parent=59 // pred_check
          %p1509 = pneg %p141
        $region62: #{tpu_custom_call.1} parent=59 // pred_check_branch
          %1511 = sbr.rel (%p1509) target = $region64
        $region63: #{tpu_custom_call.1} parent=59 // pred_region
          %s1512 = sand.u32 %s126, 1
          %s1513 = scalar_lea.sflag [#allocation4], %s1512
          %s1514 = sand.u32 %s126, 1
          %s1515 = smul.addr %s1514, 64
          %s1516 = scalar_lea.vmem [#allocation10], %s1515
          %1517 = dma.done %s1513, 1024
        $region64: #{tpu_custom_call.1} parent=59 // pred_fallthru
          _
      $region60: #{tpu_custom_call.1} parent=5 // pred_fallthru
        _
    $region6: #{tpu_custom_call.1} parent=1 // loop_footer
      %s22 = sadd.s32 1, %s18
    $region7: #{tpu_custom_call.1} parent=1 // loop_footer_branch
      %17 = sbr.rel target = $region3
    $region8: #{tpu_custom_call.1} parent=1 // loop_exit
      _
    %1518 = vsyncpa [#allocation3], 1
    %s1519 = scalar_lea.sflag [#allocation3], 1
    %1520 = vsyncpa %s1519, 1
    %1521 = vsyncpa [#allocation8], 1
    %s1522 = scalar_lea.sflag [#allocation8], 1
    %1523 = vsyncpa %s1522, 1
    %1524 = vsyncpa [#allocation4], 1
    %s1525 = scalar_lea.sflag [#allocation4], 1
    %1526 = vsyncpa %s1525, 1
    %1527 = vsyncpa [#allocation5], 1
    %s1528 = scalar_lea.sflag [#allocation5], 1
    %1529 = vsyncpa %s1528, 1

</llo_original>
